<compile_context>
chip_gen: v5e
topology: v5e:2x2
jax: 0.10.0
libtpu: 0.0.40
codegen_flags: <defaults>
</compile_context>

<pallas_src>
import functools

import jax
import jax.numpy as jnp
from jax.experimental import pallas as pl
from jax.experimental.pallas import tpu as pltpu

_TARGET_NT = 512   # pad the flattened spatial axis to a multiple of this


# ------------------------------ small helpers -------------------------------

def _choose_nt(n):
    """Lane-tile size: 512 when possible, else smallest pow2 >= n (>=128)."""
    if n >= _TARGET_NT:
        return _TARGET_NT
    m = 128
    while m < n:
        m *= 2
    return m


def _pad_last(a, n_padded):
    pad = n_padded - a.shape[-1]
    if pad:
        a = jnp.pad(a, [(0, 0)] * (a.ndim - 1) + [(0, pad)])
    return a


def _mosaic_params(semantics, block_bytes):
    """CompilerParams with a VMEM limit derived from the per-block footprint."""
    try:
        cap = getattr(pltpu.get_tpu_info(), "vmem_capacity_bytes", 64 << 20)
    except Exception:  # older jax / non-TPU trace
        cap = 64 << 20
    limit = int(min(max(3 * int(block_bytes) + (8 << 20), 32 << 20),
                    cap - (4 << 20)))
    return pltpu.CompilerParams(dimension_semantics=tuple(semantics),
                                vmem_limit_bytes=limit)


def _conv3x3_taps(x, stride):
    """x: (..., H, W) -> (9, ..., Ho, Wo); zero-padded 3x3 tap extraction."""
    *lead, H, W = x.shape
    Ho = (H - 1) // stride + 1
    Wo = (W - 1) // stride + 1
    xp = jnp.pad(x, [(0, 0)] * len(lead) + [(1, 1), (1, 1)])
    taps = []
    for di in range(3):
        for dj in range(3):
            taps.append(jax.lax.slice(
                xp,
                [0] * len(lead) + [di, dj],
                list(lead) + [di + (Ho - 1) * stride + 1,
                              dj + (Wo - 1) * stride + 1],
                [1] * len(lead) + [stride, stride]))
    return jnp.stack(taps, axis=0)


def _bn_fold(z, gamma, beta, eps=1e-5):
    """Training-mode BatchNorm folded to per-channel scale/shift. z: (E, C, N)."""
    # TODO(synk): emit per-tile sum/sum-of-squares from the conv kernels so this
    # does not re-read z from HBM.
    mean = jnp.mean(z, axis=-1)
    var = jnp.mean(jnp.square(z - mean[..., None]), axis=-1)
    inv = gamma / jnp.sqrt(var + eps)
    return inv[..., None], (beta - mean * inv)[..., None]


# ----------------------------- Pallas kernel bodies -------------------------

def _conv_mm_kernel(*refs, apply_in_act, compute_dtype):
    """Per (expert, N-tile): out = W @ vec(act(patches) * tap_mask) + bias.

    Single K = taps*cin matmul (MXU accumulation) instead of 9 small dots.
      patches:  (1, taps, cin, nt)   im2col taps of the conv input
      mask:     (1, taps, nt)        per-tap gate / padding-validity mask
      scale/shift (opt): (1, cin, 1) input-side BN affine (+ReLU) for conv2
      weights:  (1, cout, taps*cin)  pre-flattened (tap-major, cin-minor)
      bias:     (1, cout, 1)
      out:      (1, cout, nt)        lane-dense
    """
    if apply_in_act:
        p_ref, m_ref, s_ref, t_ref, w_ref, b_ref, o_ref = refs
    else:
        p_ref, m_ref, w_ref, b_ref, o_ref = refs
    taps, cin, nt = p_ref.shape[1], p_ref.shape[2], p_ref.shape[3]
    x = p_ref[0].astype(jnp.float32)                       # (taps, cin, nt)
    if apply_in_act:                                       # fused BN1 + ReLU
        x = jnp.maximum(x * s_ref[0][None, :, :] + t_ref[0][None, :, :], 0.0)
    x = x * m_ref[0][:, None, :]                           # fused gate/pad mask
    x = x.reshape(taps * cin, nt).astype(compute_dtype)
    o_ref[0] = (jnp.dot(w_ref[0], x, preferred_element_type=jnp.float32)
                + b_ref[0])


def _bn_res_relu_sum_kernel(*refs, res_affine):
    """out += relu(z*scale + shift + residual), summed over the expert axis."""
    if res_affine:
        z_ref, s_ref, t_ref, r_ref, sr_ref, tr_ref, o_ref = refs
    else:
        z_ref, s_ref, t_ref, r_ref, o_ref = refs
    e = pl.program_id(1)

    @pl.when(e == 0)
    def _():
        o_ref[...] = jnp.zeros_like(o_ref)

    y = z_ref[0] * s_ref[0] + t_ref[0]
    if res_affine:
        y = y + (r_ref[0] * sr_ref[0] + tr_ref[0])
    else:
        y = y + r_ref[0]
    o_ref[...] += jnp.maximum(y, 0.0)


def _gate_scores_kernel(xp_ref, v_ref, o_ref):
    # 1x1 gate conv folded into the patch conv: scores = (w2^T . w1) @ patches.
    o_ref[...] = jnp.dot(v_ref[...], xp_ref[...],
                         preferred_element_type=jnp.float32)


# ------------------------------ Pallas wrappers ------------------------------

def fused_conv_matmul(patches, tap_masks, weights, bias,
                      in_scale=None, in_shift=None, *, nt,
                      compute_dtype=jnp.float32):
    """z[e] = W[e] @ vec(act(patches) * tap_mask[e]) + b[e] for all experts.

    patches:   (Ep, taps, cin, Np)  Ep in {1, E}; Np a multiple of nt
    tap_masks: (Em, taps, Np)       Em in {1, E}
    weights:   (E, cout, taps*cin)
    bias:      (E, cout, 1)
    returns    (E, cout, Np) float32
    """
    Ep, taps, cin, Np = patches.shape
    Em = tap_masks.shape[0]
    E, c_out, K = weights.shape
    assert Np % nt == 0
    n_tiles = Np // nt

    # Shared patches + several experts -> expert axis innermost so the patch
    # block index is constant across consecutive steps (no redundant DMA).
    expert_inner = (Ep == 1 and E > 1)
    if expert_inner:
        grid = (n_tiles, E)
        semantics = ("parallel", "arbitrary")
        p_map = (lambda j, e: (0, 0, 0, j)) if Ep == 1 else (lambda j, e: (e, 0, 0, j))
        m_map = (lambda j, e: (0, 0, j)) if Em == 1 else (lambda j, e: (e, 0, j))
        w_map = lambda j, e: (e, 0, 0)
        v_map = lambda j, e: (e, 0, 0)
        o_map = lambda j, e: (e, 0, j)
    else:
        grid = (E, n_tiles)
        semantics = ("parallel", "parallel")
        p_map = (lambda e, j: (0, 0, 0, j)) if Ep == 1 else (lambda e, j: (e, 0, 0, j))
        m_map = (lambda e, j: (0, 0, j)) if Em == 1 else (lambda e, j: (e, 0, j))
        w_map = lambda e, j: (e, 0, 0)
        v_map = lambda e, j: (e, 0, 0)
        o_map = lambda e, j: (e, 0, j)

    in_specs = [pl.BlockSpec((1, taps, cin, nt), p_map),
                pl.BlockSpec((1, taps, nt), m_map)]
    args = [patches, tap_masks]
    if in_scale is not None:
        in_specs += [pl.BlockSpec((1, cin, 1), v_map),
                     pl.BlockSpec((1, cin, 1), v_map)]
        args += [in_scale, in_shift]
    in_specs += [pl.BlockSpec((1, c_out, K), w_map),
                 pl.BlockSpec((1, c_out, 1), v_map)]
    args += [weights, bias]

    esz = jnp.dtype(compute_dtype).itemsize
    block_bytes = (taps * cin * nt * esz + taps * nt * 4 + c_out * K * esz
                   + c_out * nt * 4 + 3 * cin * 4)
    kern = functools.partial(_conv_mm_kernel,
                             apply_in_act=in_scale is not None,
                             compute_dtype=compute_dtype)
    return pl.pallas_call(
        kern,
        out_shape=jax.ShapeDtypeStruct((E, c_out, Np), jnp.float32),
        grid=grid,
        in_specs=in_specs,
        out_specs=pl.BlockSpec((1, c_out, nt), o_map),
        compiler_params=_mosaic_params(semantics, block_bytes),
    )(*args)


def fused_bn_residual_relu_sum(z, scale, shift, resid,
                               r_scale=None, r_shift=None, *, nt):
    """out = sum_e relu(z[e]*scale[e] + shift[e] + residual[e])."""
    E, C, Np = z.shape
    Er = resid.shape[0]
    assert Np % nt == 0
    n_tiles = Np // nt
    res_affine = r_scale is not None
    grid = (n_tiles, E)   # expert (reduction) axis innermost

    r_map = (lambda j, e: (0, 0, j)) if Er == 1 else (lambda j, e: (e, 0, j))
    rc_map = (lambda j, e: (0, 0, 0)) if Er == 1 else (lambda j, e: (e, 0, 0))
    in_specs = [
        pl.BlockSpec((1, C, nt), lambda j, e: (e, 0, j)),
        pl.BlockSpec((1, C, 1), lambda j, e: (e, 0, 0)),
        pl.BlockSpec((1, C, 1), lambda j, e: (e, 0, 0)),
        pl.BlockSpec((1, C, nt), r_map),
    ]
    args = [z, scale, shift, resid]
    if res_affine:
        in_specs += [pl.BlockSpec((1, C, 1), rc_map),
                     pl.BlockSpec((1, C, 1), rc_map)]
        args += [r_scale, r_shift]

    block_bytes = 3 * C * nt * 4 + 5 * C * 4
    return pl.pallas_call(
        functools.partial(_bn_res_relu_sum_kernel, res_affine=res_affine),
        out_shape=jax.ShapeDtypeStruct((C, Np), jnp.float32),
        grid=grid,
        in_specs=in_specs,
        out_specs=pl.BlockSpec((C, nt), lambda j, e: (0, j)),
        compiler_params=_mosaic_params(("parallel", "arbitrary"), block_bytes),
    )(*args)


def _gate_spatial_masks(x_cm, w1_all, w2_all, k, p):
    """Top-k patch gating mask at full spatial resolution: (E, B, H, W)."""
    C, B, H, W = x_cm.shape
    E = w1_all.shape[0]
    h, w = H // p, W // p
    Ng = B * h * w
    Cpp = C * p * p
    xp = (x_cm.reshape(C, B, h, p, w, p)
          .transpose(0, 3, 5, 1, 2, 4)
          .reshape(Cpp, Ng))
    # Fold the 1x1 gate conv into the patch conv (no nonlinearity in between).
    v = jnp.einsum('ec,ecq->eq', w2_all.reshape(E, -1),
                   w1_all.reshape(E, w1_all.shape[1], Cpp))       # (E, Cpp)

    if Ng >= 256:
        ntg = _choose_nt(Ng)
        Ngp = Ng + (-Ng) % ntg
        xp_in = _pad_last(xp, Ngp)
    else:
        ntg, Ngp, xp_in = Ng, Ng, xp

    block_bytes = Cpp * ntg * 4 + E * Cpp * 4 + E * ntg * 4
    scores = pl.pallas_call(
        _gate_scores_kernel,
        out_shape=jax.ShapeDtypeStruct((E, Ngp), jnp.float32),
        grid=(Ngp // ntg,),
        in_specs=[pl.BlockSpec((Cpp, ntg), lambda j: (0, j)),
                  pl.BlockSpec((E, Cpp), lambda j: (0, 0))],
        out_specs=pl.BlockSpec((E, ntg), lambda j: (0, j)),
        compiler_params=_mosaic_params(("parallel",), block_bytes),
    )(xp_in, v)[:, :Ng]

    # F.softmax with no dim on a 4D tensor -> dim=1; that dim has size 1 here,
    # so every score becomes exactly 1.0 (faithful to the PyTorch quirk).
    scores = jax.nn.softmax(scores[:, None, :], axis=1)[:, 0]
    scores = scores.reshape(E, B, h * w)
    # TODO(synk): torch.topk(sorted=False) tie order is unspecified; lax.top_k
    # breaks ties toward lower indices (matches the pure-JAX reference below).
    vals, idx = jax.lax.top_k(scores, k)                          # (E, B, k)
    mask = jnp.zeros((E, B, h * w), jnp.float32)
    mask = mask.at[jnp.arange(E)[:, None, None],
                   jnp.arange(B)[None, :, None], idx].add(vals)
    mask = mask.reshape(E, B, h, w)
    mask = jnp.repeat(jnp.repeat(mask, p, axis=2), p, axis=3)     # (E, B, H, W)
    return mask


# ----------------------------- PatchMoeBasicBlock ---------------------------

def patch_moe_basic_block(x_nchw, params, *, k, exp, patch_size, stride,
                          is_first_block, compute_dtype=jnp.float32):
    B, C_in, H, W = x_nchw.shape
    C_out = params['experts'][0]['conv1_w'].shape[0]
    x_cm = jnp.transpose(x_nchw, (1, 0, 2, 3)).astype(jnp.float32)  # (C,B,H,W)

    patch_valid = k <= (H / patch_size) ** 2
    has_ds = is_first_block and stride != 1
    # NOTE: matches PyTorch — downsample only for (is_first_block and stride!=1);
    # the identity skip therefore requires C_in == C_out and stride == 1.
    if not has_ds:
        assert C_in == C_out and stride == 1, \
            "identity skip requires C_in == C_out and stride == 1 (as in PyTorch)"
    E = exp if patch_valid else 1

    Ho = (H - 1) // stride + 1
    Wo = (W - 1) // stride + 1
    N1 = B * Ho * Wo
    nt = _choose_nt(N1)
    Np = N1 + (-N1) % nt

    experts = params['experts'][:E]
    stack = lambda name: jnp.stack([p[name] for p in experts], axis=0)

    # ---- gating: tiny per-tap spatial masks (channel-invariant) -------------
    # TODO(synk): replace the im2col glue below with in-kernel halo'd patch
    # formation (single K=9*C matmul per block) to avoid the 9x HBM blow-up.
    taps_x = _conv3x3_taps(x_cm, stride)                     # (9, C, B, Ho, Wo)
    P1 = _pad_last(taps_x.reshape(9, C_in, N1), Np)[None].astype(compute_dtype)
    if patch_valid:
        w1_all = jnp.stack([g['w1'] for g in params['gates'][:E]], 0)
        w2_all = jnp.stack([g['w2'] for g in params['gates'][:E]], 0)
        mask_sp = _gate_spatial_masks(x_cm, w1_all, w2_all, k, patch_size)
        mt = _conv3x3_taps(mask_sp, stride)                  # (9, E, B, Ho, Wo)
        M1 = mt.transpose(1, 0, 2, 3, 4).reshape(E, 9, N1)
    else:
        M1 = _conv3x3_taps(jnp.ones((B, H, W), jnp.float32),
                           stride).reshape(9, N1)[None]
    M1 = _pad_last(M1, Np)

    # ---- conv1 (gate mask fused in-kernel; shared patches deduped) ----------
    W1 = jnp.stack([p['conv1_w'].transpose(0, 2, 3, 1).reshape(C_out, 9 * C_in)
                    for p in experts], 0).astype(compute_dtype)
    b1 = stack('conv1_b').reshape(E, C_out, 1)
    z1p = fused_conv_matmul(P1, M1, W1, b1, nt=nt, compute_dtype=compute_dtype)
    z1 = z1p[..., :N1]
    scale1, shift1 = _bn_fold(z1, stack('bn1_gamma'), stack('bn1_beta'))

    # ---- conv2 (BN1 + ReLU fused on the input side) --------------------------
    z1_sp = z1.reshape(E, C_out, B, Ho, Wo)
    t2 = _conv3x3_taps(z1_sp, 1)                             # (9, E, Cout, B, Ho, Wo)
    P2 = _pad_last(t2.transpose(1, 0, 2, 3, 4, 5).reshape(E, 9, C_out, N1),
                   Np).astype(compute_dtype)
    V2 = _pad_last(_conv3x3_taps(jnp.ones((B, Ho, Wo), jnp.float32), 1)
                   .reshape(9, N1)[None], Np)                # pad-validity mask
    W2 = jnp.stack([p['conv2_w'].transpose(0, 2, 3, 1).reshape(C_out, 9 * C_out)
                    for p in experts], 0).astype(compute_dtype)
    b2 = stack('conv2_b').reshape(E, C_out, 1)
    z2p = fused_conv_matmul(P2, V2, W2, b2, in_scale=scale1, in_shift=shift1,
                            nt=nt, compute_dtype=compute_dtype)
    z2 = z2p[..., :N1]
    scale2, shift2 = _bn_fold(z2, stack('bn2_gamma'), stack('bn2_beta'))

    # ---- residual + BN2 + ReLU + expert-sum (one fused kernel) ---------------
    if has_ds:
        xs = x_cm[:, :, ::stride, ::stride].reshape(C_in, N1)
        Pd = _pad_last(xs, Np)[None, None].astype(compute_dtype)  # (1,1,Cin,Np)
        Vd = _pad_last(jnp.ones((1, 1, N1), jnp.float32), Np)
        Wd = jnp.stack([p['ds_w'].reshape(C_out, C_in) for p in experts],
                       0).astype(compute_dtype)
        bd = stack('ds_b').reshape(E, C_out, 1)
        zdp = fused_conv_matmul(Pd, Vd, Wd, bd, nt=nt,
                                compute_dtype=compute_dtype)
        r_scale, r_shift = _bn_fold(zdp[..., :N1],
                                    stack('ds_gamma'), stack('ds_beta'))
        out_cm = fused_bn_residual_relu_sum(z2p, scale2, shift2, zdp,
                                            r_scale, r_shift, nt=nt)
    else:
        resid = _pad_last(x_cm.reshape(C_in, B * H * W), Np)[None]  # shared
        out_cm = fused_bn_residual_relu_sum(z2p, scale2, shift2, resid, nt=nt)

    out = out_cm[:, :N1].reshape(C_out, B, Ho, Wo)
    return jnp.transpose(out, (1, 0, 2, 3))                  # NCHW


# ----------------------- deterministic parameter init -----------------------

def init_params(key, *, k, exp, patch_size, in_channels, out_channels, stride,
                is_first_block):
    del k
    keys = iter(jax.random.split(key, 64))
    nrm = lambda shape, s: s * jax.random.normal(next(keys), shape, jnp.float32)
    gates = []
    for _ in range(exp):
        gates.append(dict(
            w1=nrm((in_channels // 2, in_channels, patch_size, patch_size), 1e-4),
            w2=nrm((1, in_channels // 2, 1, 1), 1e-4)))
    experts = []
    for _ in range(exp):
        p = dict(
            conv1_w=nrm((out_channels, in_channels, 3, 3), 0.1),
            conv1_b=nrm((out_channels,), 0.1),
            bn1_gamma=1.0 + nrm((out_channels,), 0.1),
            bn1_beta=nrm((out_channels,), 0.1),
            conv2_w=nrm((out_channels, out_channels, 3, 3), 0.1),
            conv2_b=nrm((out_channels,), 0.1),
            bn2_gamma=1.0 + nrm((out_channels,), 0.1),
            bn2_beta=nrm((out_channels,), 0.1))
        if is_first_block and stride != 1:
            p.update(
                ds_w=nrm((out_channels, in_channels, 1, 1), 0.1),
                ds_b=nrm((out_channels,), 0.1),
                ds_gamma=1.0 + nrm((out_channels,), 0.1),
                ds_beta=nrm((out_channels,), 0.1))
        experts.append(p)
    return dict(gates=gates, experts=experts)


# ------------------------- pure-JAX reference (check) ------------------------

def _ref_conv(x, w, b, stride, padding):
    out = jax.lax.conv_general_dilated(
        x, w, window_strides=(stride, stride),
        padding=((padding, padding), (padding, padding)),
        dimension_numbers=('NCHW', 'OIHW', 'NCHW'))
    if b is not None:
        out = out + b[None, :, None, None]
    return out


def _ref_bn(x, gamma, beta, eps=1e-5):
    mean = jnp.mean(x, axis=(0, 2, 3), keepdims=True)
    var = jnp.mean((x - mean) ** 2, axis=(0, 2, 3), keepdims=True)
    return (gamma[None, :, None, None] * (x - mean) / jnp.sqrt(var + eps)
            + beta[None, :, None, None])


def _ref_gate(x, w1, w2, k, patch_size):
    B, C, H, W = x.shape
    g = _ref_conv(x, w1, None, patch_size, 0)
    g = _ref_conv(g, w2, None, 1, 0)
    g = jax.nn.softmax(g, axis=1)
    b, c, h, w = g.shape
    vals, idx = jax.lax.top_k(g.reshape(b, c, h * w), k)
    mask = jnp.zeros((b, c, h * w), jnp.float32)
    mask = mask.at[jnp.arange(b)[:, None, None], jnp.zeros_like(idx), idx].add(vals)
    mask = mask.reshape(b, c, h, w)
    mask = jnp.repeat(mask, patch_size, axis=2)
    mask = jnp.repeat(mask, patch_size, axis=3)
    mask = jnp.repeat(mask, C, axis=1)
    return x * mask


def _ref_block(x, params, *, k, exp, patch_size, stride, is_first_block):
    B, C_in, H, W = x.shape
    patch_valid = k <= (H / patch_size) ** 2
    identity = x
    if patch_valid:
        gouts = [_ref_gate(x, g['w1'], g['w2'], k, patch_size)
                 for g in params['gates']]
        n_exp = exp
    else:
        gouts, n_exp = [x], 1
    has_ds = is_first_block and stride != 1
    out = 0.0
    for i in range(n_exp):
        p = params['experts'][i]
        y = jax.nn.relu(_ref_bn(
            _ref_conv(gouts[i], p['conv1_w'], p['conv1_b'], stride, 1),
            p['bn1_gamma'], p['bn1_beta']))
        y = _ref_bn(_ref_conv(y, p['conv2_w'], p['conv2_b'], 1, 1),
                    p['bn2_gamma'], p['bn2_beta'])
        if has_ds:
            init_ = _ref_bn(_ref_conv(identity, p['ds_w'], p['ds_b'], stride, 0),
                            p['ds_gamma'], p['ds_beta'])
        else:
            init_ = identity
        y = jax.nn.relu(y + init_)
        out = out + y
    return out


# ----------------------------------- main ------------------------------------

if __name__ == "__main__":
    key = jax.random.PRNGKey(0)

    # Config 1: stride=1, no downsample (identity skip), f32 self-check.
    B, C_in, H, W, C_out = 2, 8, 16, 16, 8
    cfg = dict(k=2, exp=2, patch_size=4, stride=1, is_first_block=False)
    kx, kp = jax.random.split(key)
    x = jax.random.normal(kx, (B, C_in, H, W), jnp.float32)
    params = init_params(kp, in_channels=C_in, out_channels=C_out, **cfg)
    block1 = jax.jit(functools.partial(patch_moe_basic_block, **cfg))
    out = jax.block_until_ready(block1(x, params))
    ref = _ref_block(x, params, **cfg)
    assert out.shape == (B, C_out, H, W)
    assert bool(jnp.all(jnp.isfinite(out)))
    err = float(jnp.max(jnp.abs(out - ref)))
    assert err < 5e-2, f"mismatch vs reference: {err}"

    # Config 1, bf16 compute path (production setting): loose smoke check.
    block1_bf16 = jax.jit(functools.partial(
        patch_moe_basic_block, compute_dtype=jnp.bfloat16, **cfg))
    out_bf16 = jax.block_until_ready(block1_bf16(x, params))
    assert bool(jnp.all(jnp.isfinite(out_bf16)))
    err_bf16 = float(jnp.max(jnp.abs(out_bf16 - ref)))
    assert err_bf16 < 1.0, f"bf16 path grossly off: {err_bf16}"

    # Config 2: stride=2, first block -> exercises the downsample path.
    cfg2 = dict(k=2, exp=2, patch_size=4, stride=2, is_first_block=True)
    C_out2 = 16
    kx2, kp2 = jax.random.split(jax.random.PRNGKey(1))
    x2 = jax.random.normal(kx2, (B, C_in, H, W), jnp.float32)
    params2 = init_params(kp2, in_channels=C_in, out_channels=C_out2, **cfg2)
    block2 = jax.jit(functools.partial(patch_moe_basic_block, **cfg2))
    out2 = jax.block_until_ready(block2(x2, params2))
    ref2 = _ref_block(x2, params2, **cfg2)
    assert out2.shape == (B, C_out2, H // 2, W // 2)
    err2 = float(jnp.max(jnp.abs(out2 - ref2)))
    assert err2 < 5e-2, f"mismatch vs reference (downsample): {err2}"

    print("KERNEL_OK")
</pallas_src>

<mosaic_0001>
module attributes {stable_mosaic.version = 11 : i64} {
  func.func @_gate_scores_kernel(%arg0: i32, %arg1: memref<128x32xf32, #tpu.memory_space<vmem>>, %arg2: memref<2x128xf32, #tpu.memory_space<vmem>>, %arg3: memref<2x32xf32, #tpu.memory_space<vmem>>) attributes {dimension_semantics = [#tpu.dimension_semantics<parallel>], iteration_bounds = array<i64: 1>, scalar_prefetch = 0 : i64, scratch_operands = 0 : i64, tpu.core_type = #tpu.core_type<tc>, window_params = [{transform_indices = @transform_0, window_bounds = array<i64: 128, 32>}, {pipeline_mode = #tpu.pipeline_mode<synchronous>, transform_indices = @transform_1, window_bounds = array<i64: 2, 128>}, {transform_indices = @transform_2, window_bounds = array<i64: 2, 32>}]} {
    %c0 = arith.constant 0 : index
    %c0_0 = arith.constant 0 : index
    %0 = vector.load %arg2[%c0, %c0_0] : memref<2x128xf32, #tpu.memory_space<vmem>>, vector<2x128xf32>
    %c0_1 = arith.constant 0 : index
    %c0_2 = arith.constant 0 : index
    %1 = vector.load %arg1[%c0_1, %c0_2] : memref<128x32xf32, #tpu.memory_space<vmem>>, vector<128x32xf32>
    %cst = arith.constant dense<0.000000e+00> : vector<2x32xf32>
    %2 = tpu.matmul %0, %1, %cst {dimension_numbers = #tpu.dot_dimension_numbers<[1], [0], [0], [1], [0, 0, 1, 1], [], []>} : vector<2x128xf32>, vector<128x32xf32>, vector<2x32xf32> -> vector<2x32xf32>
    %c0_3 = arith.constant 0 : index
    %c0_4 = arith.constant 0 : index
    %3 = vector.load %arg3[%c0_3, %c0_4] : memref<2x32xf32, #tpu.memory_space<vmem>>, vector<2x32xf32>
    tpu.vector_store %arg3[%c0_3, %c0_4], %2 {strides = array<i32>} : memref<2x32xf32, #tpu.memory_space<vmem>>, vector<2x32xf32>,
    return
  }
  func.func @transform_0(%arg0: i32) -> (i32, i32) {
    %c0_i32 = arith.constant 0 : i32
    %c0_i32_0 = arith.constant 0 : i32
    return %c0_i32, %arg0 : i32, i32
  }
  func.func @transform_1(%arg0: i32) -> (i32, i32) {
    %c0_i32 = arith.constant 0 : i32
    %c0_i32_0 = arith.constant 0 : i32
    %c0_i32_1 = arith.constant 0 : i32
    return %c0_i32, %c0_i32_0 : i32, i32
  }
  func.func @transform_2(%arg0: i32) -> (i32, i32) {
    %c0_i32 = arith.constant 0 : i32
    %c0_i32_0 = arith.constant 0 : i32
    return %c0_i32, %arg0 : i32, i32
  }
}

module attributes {stable_mosaic.version = 11 : i64} {
  func.func @_conv_mm_kernel(%arg0: i32, %arg1: i32, %arg2: memref<1x9x8x512xf32, #tpu.memory_space<vmem>>, %arg3: memref<1x9x512xf32, #tpu.memory_space<vmem>>, %arg4: memref<1x8x72xf32, #tpu.memory_space<vmem>>, %arg5: memref<1x8x1xf32, #tpu.memory_space<vmem>>, %arg6: memref<1x8x512xf32, #tpu.memory_space<vmem>>) attributes {dimension_semantics = [#tpu.dimension_semantics<parallel>, #tpu.dimension_semantics<arbitrary>], iteration_bounds = array<i64: 1, 2>, scalar_prefetch = 0 : i64, scratch_operands = 0 : i64, tpu.core_type = #tpu.core_type<tc>, window_params = [{transform_indices = @transform_0, window_bounds = array<i64: 1, 9, 8, 512>}, {transform_indices = @transform_1, window_bounds = array<i64: 1, 9, 512>}, {transform_indices = @transform_2, window_bounds = array<i64: 1, 8, 72>}, {transform_indices = @transform_3, window_bounds = array<i64: 1, 8, 1>}, {transform_indices = @transform_4, window_bounds = array<i64: 1, 8, 512>}]} {
    %c0 = arith.constant 0 : index
    %c0_0 = arith.constant 0 : index
    %c0_1 = arith.constant 0 : index
    %c0_2 = arith.constant 0 : index
    %0 = vector.load %arg2[%c0, %c0_0, %c0_1, %c0_2] : memref<1x9x8x512xf32, #tpu.memory_space<vmem>>, vector<1x9x8x512xf32>
    %1 = vector.shape_cast %0 : vector<1x9x8x512xf32> to vector<9x8x512xf32>
    %c0_3 = arith.constant 0 : index
    %c0_4 = arith.constant 0 : index
    %c0_5 = arith.constant 0 : index
    %2 = vector.load %arg3[%c0_3, %c0_4, %c0_5] : memref<1x9x512xf32, #tpu.memory_space<vmem>>, vector<1x9x512xf32>
    %3 = vector.shape_cast %2 : vector<1x9x512xf32> to vector<9x512xf32>
    %4 = vector.shape_cast %3 : vector<9x512xf32> to vector<9x1x512xf32>
    %5 = vector.broadcast %4 : vector<9x1x512xf32> to vector<9x8x512xf32>
    %6 = arith.mulf %1, %5 : vector<9x8x512xf32>
    %7 = vector.shape_cast %6 : vector<9x8x512xf32> to vector<72x512xf32>
    %c0_6 = arith.constant 0 : index
    %c0_7 = arith.constant 0 : index
    %c0_8 = arith.constant 0 : index
    %8 = vector.load %arg4[%c0_6, %c0_7, %c0_8] : memref<1x8x72xf32, #tpu.memory_space<vmem>>, vector<1x8x72xf32>
    %9 = vector.shape_cast %8 : vector<1x8x72xf32> to vector<8x72xf32>
    %cst = arith.constant dense<0.000000e+00> : vector<8x512xf32>
    %10 = tpu.matmul %9, %7, %cst {dimension_numbers = #tpu.dot_dimension_numbers<[1], [0], [0], [1], [0, 0, 1, 1], [], []>} : vector<8x72xf32>, vector<72x512xf32>, vector<8x512xf32> -> vector<8x512xf32>
    %c0_9 = arith.constant 0 : index
    %c0_10 = arith.constant 0 : index
    %c0_11 = arith.constant 0 : index
    %11 = vector.load %arg5[%c0_9, %c0_10, %c0_11] : memref<1x8x1xf32, #tpu.memory_space<vmem>>, vector<1x8x1xf32>
    %12 = vector.shape_cast %11 : vector<1x8x1xf32> to vector<8x1xf32>
    %13 = vector.broadcast %12 : vector<8x1xf32> to vector<8x512xf32>
    %14 = arith.addf %10, %13 : vector<8x512xf32>
    %c0_12 = arith.constant 0 : index
    %c0_13 = arith.constant 0 : index
    %c0_14 = arith.constant 0 : index
    %15 = vector.load %arg6[%c0_12, %c0_13, %c0_14] : memref<1x8x512xf32, #tpu.memory_space<vmem>>, vector<1x8x512xf32>
    %16 = vector.shape_cast %15 : vector<1x8x512xf32> to vector<8x512xf32>
    %17 = vector.shape_cast %14 : vector<8x512xf32> to vector<1x8x512xf32>
    tpu.vector_store %arg6[%c0_12, %c0_13, %c0_14], %17 {strides = array<i32>} : memref<1x8x512xf32, #tpu.memory_space<vmem>>, vector<1x8x512xf32>,
    return
  }
  func.func @transform_0(%arg0: i32, %arg1: i32) -> (i32, i32, i32, i32) {
    %c0_i32 = arith.constant 0 : i32
    %c0_i32_0 = arith.constant 0 : i32
    %c0_i32_1 = arith.constant 0 : i32
    %c0_i32_2 = arith.constant 0 : i32
    return %c0_i32, %c0_i32_0, %c0_i32_1, %arg0 : i32, i32, i32, i32
  }
  func.func @transform_1(%arg0: i32, %arg1: i32) -> (i32, i32, i32) {
    %c0_i32 = arith.constant 0 : i32
    %c0_i32_0 = arith.constant 0 : i32
    return %arg1, %c0_i32, %arg0 : i32, i32, i32
  }
  func.func @transform_2(%arg0: i32, %arg1: i32) -> (i32, i32, i32) {
    %c0_i32 = arith.constant 0 : i32
    %c0_i32_0 = arith.constant 0 : i32
    %c0_i32_1 = arith.constant 0 : i32
    return %arg1, %c0_i32, %c0_i32_0 : i32, i32, i32
  }
  func.func @transform_3(%arg0: i32, %arg1: i32) -> (i32, i32, i32) {
    %c0_i32 = arith.constant 0 : i32
    %c0_i32_0 = arith.constant 0 : i32
    %c0_i32_1 = arith.constant 0 : i32
    return %arg1, %c0_i32, %c0_i32_0 : i32, i32, i32
  }
  func.func @transform_4(%arg0: i32, %arg1: i32) -> (i32, i32, i32) {
    %c0_i32 = arith.constant 0 : i32
    %c0_i32_0 = arith.constant 0 : i32
    return %arg1, %c0_i32, %arg0 : i32, i32, i32
  }
}

module attributes {stable_mosaic.version = 11 : i64} {
  func.func @_conv_mm_kernel(%arg0: i32, %arg1: i32, %arg2: memref<1x9x8x512xf32, #tpu.memory_space<vmem>>, %arg3: memref<1x9x512xf32, #tpu.memory_space<vmem>>, %arg4: memref<1x8x1xf32, #tpu.memory_space<vmem>>, %arg5: memref<1x8x1xf32, #tpu.memory_space<vmem>>, %arg6: memref<1x8x72xf32, #tpu.memory_space<vmem>>, %arg7: memref<1x8x1xf32, #tpu.memory_space<vmem>>, %arg8: memref<1x8x512xf32, #tpu.memory_space<vmem>>) attributes {dimension_semantics = [#tpu.dimension_semantics<parallel>, #tpu.dimension_semantics<parallel>], iteration_bounds = array<i64: 2, 1>, scalar_prefetch = 0 : i64, scratch_operands = 0 : i64, tpu.core_type = #tpu.core_type<tc>, window_params = [{transform_indices = @transform_0, window_bounds = array<i64: 1, 9, 8, 512>}, {transform_indices = @transform_1, window_bounds = array<i64: 1, 9, 512>}, {transform_indices = @transform_2, window_bounds = array<i64: 1, 8, 1>}, {transform_indices = @transform_3, window_bounds = array<i64: 1, 8, 1>}, {transform_indices = @transform_4, window_bounds = array<i64: 1, 8, 72>}, {transform_indices = @transform_5, window_bounds = array<i64: 1, 8, 1>}, {transform_indices = @transform_6, window_bounds = array<i64: 1, 8, 512>}]} {
    %c0 = arith.constant 0 : index
    %c0_0 = arith.constant 0 : index
    %c0_1 = arith.constant 0 : index
    %c0_2 = arith.constant 0 : index
    %0 = vector.load %arg2[%c0, %c0_0, %c0_1, %c0_2] : memref<1x9x8x512xf32, #tpu.memory_space<vmem>>, vector<1x9x8x512xf32>
    %1 = vector.shape_cast %0 : vector<1x9x8x512xf32> to vector<9x8x512xf32>
    %c0_3 = arith.constant 0 : index
    %c0_4 = arith.constant 0 : index
    %c0_5 = arith.constant 0 : index
    %2 = vector.load %arg4[%c0_3, %c0_4, %c0_5] : memref<1x8x1xf32, #tpu.memory_space<vmem>>, vector<1x8x1xf32>
    %3 = vector.shape_cast %2 : vector<1x8x1xf32> to vector<8x1xf32>
    %4 = vector.shape_cast %3 : vector<8x1xf32> to vector<1x8x1xf32>
    %5 = vector.broadcast %4 : vector<1x8x1xf32> to vector<9x8x512xf32>
    %6 = arith.mulf %1, %5 : vector<9x8x512xf32>
    %c0_6 = arith.constant 0 : index
    %c0_7 = arith.constant 0 : index
    %c0_8 = arith.constant 0 : index
    %7 = vector.load %arg5[%c0_6, %c0_7, %c0_8] : memref<1x8x1xf32, #tpu.memory_space<vmem>>, vector<1x8x1xf32>
    %8 = vector.shape_cast %7 : vector<1x8x1xf32> to vector<8x1xf32>
    %9 = vector.shape_cast %8 : vector<8x1xf32> to vector<1x8x1xf32>
    %10 = vector.broadcast %9 : vector<1x8x1xf32> to vector<9x8x512xf32>
    %11 = arith.addf %6, %10 : vector<9x8x512xf32>
    %cst = arith.constant 0.000000e+00 : f32
    %12 = vector.broadcast %cst : f32 to vector<9x8x512xf32>
    %13 = arith.maximumf %11, %12 : vector<9x8x512xf32>
    %c0_9 = arith.constant 0 : index
    %c0_10 = arith.constant 0 : index
    %c0_11 = arith.constant 0 : index
    %14 = vector.load %arg3[%c0_9, %c0_10, %c0_11] : memref<1x9x512xf32, #tpu.memory_space<vmem>>, vector<1x9x512xf32>
    %15 = vector.shape_cast %14 : vector<1x9x512xf32> to vector<9x512xf32>
    %16 = vector.shape_cast %15 : vector<9x512xf32> to vector<9x1x512xf32>
    %17 = vector.broadcast %16 : vector<9x1x512xf32> to vector<9x8x512xf32>
    %18 = arith.mulf %13, %17 : vector<9x8x512xf32>
    %19 = vector.shape_cast %18 : vector<9x8x512xf32> to vector<72x512xf32>
    %c0_12 = arith.constant 0 : index
    %c0_13 = arith.constant 0 : index
    %c0_14 = arith.constant 0 : index
    %20 = vector.load %arg6[%c0_12, %c0_13, %c0_14] : memref<1x8x72xf32, #tpu.memory_space<vmem>>, vector<1x8x72xf32>
    %21 = vector.shape_cast %20 : vector<1x8x72xf32> to vector<8x72xf32>
    %cst_15 = arith.constant dense<0.000000e+00> : vector<8x512xf32>
    %22 = tpu.matmul %21, %19, %cst_15 {dimension_numbers = #tpu.dot_dimension_numbers<[1], [0], [0], [1], [0, 0, 1, 1], [], []>} : vector<8x72xf32>, vector<72x512xf32>, vector<8x512xf32> -> vector<8x512xf32>
    %c0_16 = arith.constant 0 : index
    %c0_17 = arith.constant 0 : index
    %c0_18 = arith.constant 0 : index
    %23 = vector.load %arg7[%c0_16, %c0_17, %c0_18] : memref<1x8x1xf32, #tpu.memory_space<vmem>>, vector<1x8x1xf32>
    %24 = vector.shape_cast %23 : vector<1x8x1xf32> to vector<8x1xf32>
    %25 = vector.broadcast %24 : vector<8x1xf32> to vector<8x512xf32>
    %26 = arith.addf %22, %25 : vector<8x512xf32>
    %c0_19 = arith.constant 0 : index
    %c0_20 = arith.constant 0 : index
    %c0_21 = arith.constant 0 : index
    %27 = vector.load %arg8[%c0_19, %c0_20, %c0_21] : memref<1x8x512xf32, #tpu.memory_space<vmem>>, vector<1x8x512xf32>
    %28 = vector.shape_cast %27 : vector<1x8x512xf32> to vector<8x512xf32>
    %29 = vector.shape_cast %26 : vector<8x512xf32> to vector<1x8x512xf32>
    tpu.vector_store %arg8[%c0_19, %c0_20, %c0_21], %29 {strides = array<i32>} : memref<1x8x512xf32, #tpu.memory_space<vmem>>, vector<1x8x512xf32>,
    return
  }
  func.func @transform_0(%arg0: i32, %arg1: i32) -> (i32, i32, i32, i32) {
    %c0_i32 = arith.constant 0 : i32
    %c0_i32_0 = arith.constant 0 : i32
    %c0_i32_1 = arith.constant 0 : i32
    return %arg0, %c0_i32, %c0_i32_0, %arg1 : i32, i32, i32, i32
  }
  func.func @transform_1(%arg0: i32, %arg1: i32) -> (i32, i32, i32) {
    %c0_i32 = arith.constant 0 : i32
    %c0_i32_0 = arith.constant 0 : i32
    %c0_i32_1 = arith.constant 0 : i32
    return %c0_i32, %c0_i32_0, %arg1 : i32, i32, i32
  }
  func.func @transform_2(%arg0: i32, %arg1: i32) -> (i32, i32, i32) {
    %c0_i32 = arith.constant 0 : i32
    %c0_i32_0 = arith.constant 0 : i32
    %c0_i32_1 = arith.constant 0 : i32
    return %arg0, %c0_i32, %c0_i32_0 : i32, i32, i32
  }
  func.func @transform_3(%arg0: i32, %arg1: i32) -> (i32, i32, i32) {
    %c0_i32 = arith.constant 0 : i32
    %c0_i32_0 = arith.constant 0 : i32
    %c0_i32_1 = arith.constant 0 : i32
    return %arg0, %c0_i32, %c0_i32_0 : i32, i32, i32
  }
  func.func @transform_4(%arg0: i32, %arg1: i32) -> (i32, i32, i32) {
    %c0_i32 = arith.constant 0 : i32
    %c0_i32_0 = arith.constant 0 : i32
    %c0_i32_1 = arith.constant 0 : i32
    return %arg0, %c0_i32, %c0_i32_0 : i32, i32, i32
  }
  func.func @transform_5(%arg0: i32, %arg1: i32) -> (i32, i32, i32) {
    %c0_i32 = arith.constant 0 : i32
    %c0_i32_0 = arith.constant 0 : i32
    %c0_i32_1 = arith.constant 0 : i32
    return %arg0, %c0_i32, %c0_i32_0 : i32, i32, i32
  }
  func.func @transform_6(%arg0: i32, %arg1: i32) -> (i32, i32, i32) {
    %c0_i32 = arith.constant 0 : i32
    %c0_i32_0 = arith.constant 0 : i32
    return %arg0, %c0_i32, %arg1 : i32, i32, i32
  }
}

module attributes {stable_mosaic.version = 11 : i64} {
  func.func @_bn_res_relu_sum_kernel(%arg0: i32, %arg1: i32, %arg2: memref<1x8x512xf32, #tpu.memory_space<vmem>>, %arg3: memref<1x8x1xf32, #tpu.memory_space<vmem>>, %arg4: memref<1x8x1xf32, #tpu.memory_space<vmem>>, %arg5: memref<1x8x512xf32, #tpu.memory_space<vmem>>, %arg6: memref<8x512xf32, #tpu.memory_space<vmem>>) attributes {dimension_semantics = [#tpu.dimension_semantics<parallel>, #tpu.dimension_semantics<arbitrary>], iteration_bounds = array<i64: 1, 2>, scalar_prefetch = 0 : i64, scratch_operands = 0 : i64, tpu.core_type = #tpu.core_type<tc>, window_params = [{transform_indices = @transform_0, window_bounds = array<i64: 1, 8, 512>}, {transform_indices = @transform_1, window_bounds = array<i64: 1, 8, 1>}, {transform_indices = @transform_2, window_bounds = array<i64: 1, 8, 1>}, {transform_indices = @transform_3, window_bounds = array<i64: 1, 8, 512>}, {transform_indices = @transform_4, window_bounds = array<i64: 8, 512>}]} {
    %c0_i32 = arith.constant 0 : i32
    %0 = arith.cmpi eq, %arg1, %c0_i32 : i32
    %1 = arith.extui %0 : i1 to i32
    %c0_i32_0 = arith.constant 0 : i32
    %2 = arith.cmpi ne, %1, %c0_i32_0 : i32
    scf.if %2 {
      %cst_16 = arith.constant 0.000000e+00 : f32
      %21 = vector.broadcast %cst_16 : f32 to vector<8x512xf32>
      %c0_17 = arith.constant 0 : index
      %c0_18 = arith.constant 0 : index
      %22 = vector.load %arg6[%c0_17, %c0_18] : memref<8x512xf32, #tpu.memory_space<vmem>>, vector<8x512xf32>
      tpu.vector_store %arg6[%c0_17, %c0_18], %21 {strides = array<i32>} : memref<8x512xf32, #tpu.memory_space<vmem>>, vector<8x512xf32>,
    } else {
    }
    %c0 = arith.constant 0 : index
    %c0_1 = arith.constant 0 : index
    %c0_2 = arith.constant 0 : index
    %3 = vector.load %arg2[%c0, %c0_1, %c0_2] : memref<1x8x512xf32, #tpu.memory_space<vmem>>, vector<1x8x512xf32>
    %4 = vector.shape_cast %3 : vector<1x8x512xf32> to vector<8x512xf32>
    %c0_3 = arith.constant 0 : index
    %c0_4 = arith.constant 0 : index
    %c0_5 = arith.constant 0 : index
    %5 = vector.load %arg3[%c0_3, %c0_4, %c0_5] : memref<1x8x1xf32, #tpu.memory_space<vmem>>, vector<1x8x1xf32>
    %6 = vector.shape_cast %5 : vector<1x8x1xf32> to vector<8x1xf32>
    %7 = vector.broadcast %6 : vector<8x1xf32> to vector<8x512xf32>
    %8 = arith.mulf %4, %7 : vector<8x512xf32>
    %c0_6 = arith.constant 0 : index
    %c0_7 = arith.constant 0 : index
    %c0_8 = arith.constant 0 : index
    %9 = vector.load %arg4[%c0_6, %c0_7, %c0_8] : memref<1x8x1xf32, #tpu.memory_space<vmem>>, vector<1x8x1xf32>
    %10 = vector.shape_cast %9 : vector<1x8x1xf32> to vector<8x1xf32>
    %11 = vector.broadcast %10 : vector<8x1xf32> to vector<8x512xf32>
    %12 = arith.addf %8, %11 : vector<8x512xf32>
    %c0_9 = arith.constant 0 : index
    %c0_10 = arith.constant 0 : index
    %c0_11 = arith.constant 0 : index
    %13 = vector.load %arg5[%c0_9, %c0_10, %c0_11] : memref<1x8x512xf32, #tpu.memory_space<vmem>>, vector<1x8x512xf32>
    %14 = vector.shape_cast %13 : vector<1x8x512xf32> to vector<8x512xf32>
    %15 = arith.addf %12, %14 : vector<8x512xf32>
    %c0_12 = arith.constant 0 : index
    %c0_13 = arith.constant 0 : index
    %16 = vector.load %arg6[%c0_12, %c0_13] : memref<8x512xf32, #tpu.memory_space<vmem>>, vector<8x512xf32>
    %cst = arith.constant 0.000000e+00 : f32
    %17 = vector.broadcast %cst : f32 to vector<8x512xf32>
    %18 = arith.maximumf %15, %17 : vector<8x512xf32>
    %19 = arith.addf %16, %18 : vector<8x512xf32>
    %c0_14 = arith.constant 0 : index
    %c0_15 = arith.constant 0 : index
    %20 = vector.load %arg6[%c0_14, %c0_15] : memref<8x512xf32, #tpu.memory_space<vmem>>, vector<8x512xf32>
    tpu.vector_store %arg6[%c0_14, %c0_15], %19 {strides = array<i32>} : memref<8x512xf32, #tpu.memory_space<vmem>>, vector<8x512xf32>,
    return
  }
  func.func @transform_0(%arg0: i32, %arg1: i32) -> (i32, i32, i32) {
    %c0_i32 = arith.constant 0 : i32
    %c0_i32_0 = arith.constant 0 : i32
    return %arg1, %c0_i32, %arg0 : i32, i32, i32
  }
  func.func @transform_1(%arg0: i32, %arg1: i32) -> (i32, i32, i32) {
    %c0_i32 = arith.constant 0 : i32
    %c0_i32_0 = arith.constant 0 : i32
    %c0_i32_1 = arith.constant 0 : i32
    return %arg1, %c0_i32, %c0_i32_0 : i32, i32, i32
  }
  func.func @transform_2(%arg0: i32, %arg1: i32) -> (i32, i32, i32) {
    %c0_i32 = arith.constant 0 : i32
    %c0_i32_0 = arith.constant 0 : i32
    %c0_i32_1 = arith.constant 0 : i32
    return %arg1, %c0_i32, %c0_i32_0 : i32, i32, i32
  }
  func.func @transform_3(%arg0: i32, %arg1: i32) -> (i32, i32, i32) {
    %c0_i32 = arith.constant 0 : i32
    %c0_i32_0 = arith.constant 0 : i32
    %c0_i32_1 = arith.constant 0 : i32
    return %c0_i32, %c0_i32_0, %arg0 : i32, i32, i32
  }
  func.func @transform_4(%arg0: i32, %arg1: i32) -> (i32, i32) {
    %c0_i32 = arith.constant 0 : i32
    %c0_i32_0 = arith.constant 0 : i32
    return %c0_i32, %arg0 : i32, i32
  }
}

</mosaic_0001>

<llo_original>
// kernel: patch_moe_basic_block.4
$region0: #{patch_moe_basic_block.4}
  #allocation0 [shape = 'u32[]', space=smem, size = 0x4, offset = 0x4, fixed_abs, tag = 'smem constant byte address 0x4 - core index']
  #allocation1 [shape = 'u32[72,128]{1,0:T(1,128)}', space=vmem, size = 0x9000, scoped, tag = 'internal scratch']
  %s0 = inlined_call_operand.vmem [shape: f32[128,32], index: 0, kind: input, shape index: {}]
  %s1 = inlined_call_operand.vmem [shape: f32[2,128], index: 1, kind: input, shape index: {}]
  %s2 = inlined_call_operand.vmem [shape: f32[2,32], index: 2, kind: output, shape index: {}]
  %s3 = sld [smem:[#allocation0]]
  $region18: #{patch_moe_basic_block.4} parent=0
    _
  %s5 = ssub.s32 1, %s3
  %s6 = scalar_select 0, %s5, %s3
  // Predicated region
  $region2: #{patch_moe_basic_block.4} parent=0 // pred_check
    _
  $region3: #{patch_moe_basic_block.4} parent=0 // pred_check_branch
    %8 = sbr.rel (0) target = $region5
  $region4: #{patch_moe_basic_block.4} parent=0 // pred_region
    _
  $region5: #{patch_moe_basic_block.4} parent=0 // pred_fallthru
    _
  // Predicated region
  $region6: #{patch_moe_basic_block.4} parent=0 // pred_check
    _
  $region7: #{patch_moe_basic_block.4} parent=0 // pred_check_branch
    %10 = sbr.rel (0) target = $region9
  $region8: #{patch_moe_basic_block.4} parent=0 // pred_region
    _
  $region9: #{patch_moe_basic_block.4} parent=0 // pred_fallthru
    _
  %v11 = vld [vmem:[%s1] sm:$0x3]
  %v12 = vld [vmem:[%s0] sm:$0xff]
  %v13 = vld [vmem:[%s0 + $0x8] sm:$0xff]
  %v14 = vld [vmem:[%s0 + $0x10] sm:$0xff]
  %v15 = vld [vmem:[%s0 + $0x18] sm:$0xff]
  %v16 = vld [vmem:[%s0 + $0x20] sm:$0xff]
  %v17 = vld [vmem:[%s0 + $0x28] sm:$0xff]
  %v18 = vld [vmem:[%s0 + $0x30] sm:$0xff]
  %v19 = vld [vmem:[%s0 + $0x38] sm:$0xff]
  %v20 = vld [vmem:[%s0 + $0x40] sm:$0xff]
  %v21 = vld [vmem:[%s0 + $0x48] sm:$0xff]
  %v22 = vld [vmem:[%s0 + $0x50] sm:$0xff]
  %v23 = vld [vmem:[%s0 + $0x58] sm:$0xff]
  %v24 = vld [vmem:[%s0 + $0x60] sm:$0xff]
  %v25 = vld [vmem:[%s0 + $0x68] sm:$0xff]
  %v26 = vld [vmem:[%s0 + $0x70] sm:$0xff]
  %v27 = vld [vmem:[%s0 + $0x78] sm:$0xff]
  %28 = vmatpush.msra.mxu0 %v27
  %29 = vmatpush.msra.mxu0 %v26
  %30 = vmatpush.msra.mxu0 %v25
  %31 = vmatpush.msra.mxu0 %v24
  %32 = vmatpush.msra.mxu0 %v23
  %33 = vmatpush.msra.mxu0 %v22
  %34 = vmatpush.msra.mxu0 %v21
  %35 = vmatpush.msra.mxu0 %v20
  %36 = vmatpush.msra.mxu0 %v19
  %37 = vmatpush.msra.mxu0 %v18
  %38 = vmatpush.msra.mxu0 %v17
  %39 = vmatpush.msra.mxu0 %v16
  %40 = vmatpush.msra.mxu0 %v15
  %41 = vmatpush.msra.mxu0 %v14
  %42 = vmatpush.msra.mxu0 %v13
  %43 = vmatpush.msra.mxu0 %v12
  %44 = vmatmul.f32.gmra.mxu0 %v11
  %v45 = vpop.f32.mrf.mxu0
  %v46 = vadd.f32 0.0, %v45
  %47 = vdwg.mxu0
  %vm48 = vcmask 254976
  %49 = vst.msk [vmem:[%s2] sm:$0x3] %vm48, %v46
  // Predicated region
  $region10: #{patch_moe_basic_block.4} parent=0 // pred_check
    _
  $region11: #{patch_moe_basic_block.4} parent=0 // pred_check_branch
    %51 = sbr.rel (0) target = $region13
  $region12: #{patch_moe_basic_block.4} parent=0 // pred_region
    _
  $region13: #{patch_moe_basic_block.4} parent=0 // pred_fallthru
    _
  // Predicated region
  $region14: #{patch_moe_basic_block.4} parent=0 // pred_check
    _
  $region15: #{patch_moe_basic_block.4} parent=0 // pred_check_branch
    %53 = sbr.rel (0) target = $region17
  $region16: #{patch_moe_basic_block.4} parent=0 // pred_region
    _
  $region17: #{patch_moe_basic_block.4} parent=0 // pred_fallthru
    _

// kernel: patch_moe_basic_block.5
$region0: #{patch_moe_basic_block.5}
  #allocation0 [shape = 'u32[]', space=smem, size = 0x4, offset = 0x4, fixed_abs, tag = 'smem constant byte address 0x4 - core index']
  #allocation1 [shape = 'u32[72,128]{1,0:T(1,128)}', space=vmem, size = 0x9000, scoped, tag = 'internal scratch']
  %s0 = inlined_call_operand.vmem [shape: f32[1,9,8,512], index: 0, kind: input, shape index: {}]
  %s1 = inlined_call_operand.vmem [shape: f32[2,9,512], index: 1, kind: input, shape index: {}]
  %s2 = inlined_call_operand.vmem [shape: f32[2,8,72], index: 2, kind: input, shape index: {}]
  %s3 = inlined_call_operand.vmem [shape: f32[2,8,1], index: 3, kind: input, shape index: {}]
  %s4 = inlined_call_operand.vmem [shape: f32[2,8,512], index: 4, kind: output, shape index: {}]
  %s5 = sld [smem:[#allocation0]]
  $region49: #{patch_moe_basic_block.5} parent=0
    _
  %s7 = ssub.s32 1, %s5
  %s8 = scalar_select 0, %s7, %s5
  loop: start=0, step=1, limit=4
  $region2: #{patch_moe_basic_block.5} parent=0 // loop_pre_header
    _
  $region3: #{patch_moe_basic_block.5} parent=0 // loop_header
    %s10 = sphi 0, %s14
    %p11 = scmp.ge.s32.totalorder %s10, 4
    %s17 = sphi 0, %s29
    %s18 = sphi 0, %s25
    %s19 = sphi 0, %s17
    %s20 = sphi 0, %s18
    %s21 = sphi 0, %s19
    %s22 = sphi 0, %s20
    %s32 = sphi 0, %s34
    %s35 = sphi 0, %s32
    %s36 = sphi 0, %s35
    %s52 = sphi 0, %s36
    %s60 = sphi 0, %s62
    %s63 = sphi 0, %s60
    %s64 = sphi 0, %s63
    %s80 = sphi 0, %s64
    %s86 = sphi 0, %s88
    %s89 = sphi 0, %s86
    %s90 = sphi 0, %s89
    %s106 = sphi 0, %s90
    %s112 = sphi 0, %s114
    %s115 = sphi 0, %s112
    %s116 = sphi 0, %s115
    %s132 = sphi 0, %s116
    %s140 = sphi 0, %s142
    %s143 = sphi 0, %s140
    %s144 = sphi 0, %s143
    %s160 = sphi 0, %s144
  $region4: #{patch_moe_basic_block.5} parent=0 // loop_header_branch
    %13 = sbr.rel (%p11) target = $region8
  $region5: #{patch_moe_basic_block.5} parent=0 // loop_body
    %s15 = ssub.s32 %s10, 1
    %s16 = ssub.s32 %s10, 2
    %s23 = sadd.s32 1, %s18
    %p24 = scmp.ge.s32.totalorder %s23, 2
    %s25 = scalar_select %p24, 0, %s23
    %s26 = sadd.s32 1, %s17
    %s27 = scalar_select %p24, %s26, %s17
    %p28 = scmp.ge.s32.totalorder %s27, 1
    %s29 = scalar_select %p28, 0, %s27
    %s30 = ssub.s32 %s17, %s29
    %p31 = scmp.eq.s32.totalorder %s30, 0
    %s33 = sadd.s32 %s32, 1
    %s34 = scalar_select %p31, %s32, %s33
    %p37 = pneg %p31
    %p38 = scmp.eq.s32.totalorder %s10, 1
    %p39 = por %p37, %p38
    %p40 = scmp.ne.s32.totalorder %s32, %s35
    %p41 = scmp.eq.s32.totalorder %s10, 0
    %p42 = por %p40, %p41
    %p43 = scmp.ne.s32.totalorder %s32, %s35
    %p44 = scmp.eq.s32.totalorder %s15, 1
    %p45 = por %p43, %p44
    %p46 = scmp.ne.s32.totalorder %s35, %s36
    %p47 = scmp.eq.s32.totalorder %s15, 0
    %p48 = por %p46, %p47
    %p49 = scmp.ne.s32.totalorder %s35, %s36
    %p50 = scmp.eq.s32.totalorder %s16, 1
    %p51 = por %p49, %p50
    %p53 = scmp.ne.s32.totalorder %s36, %s52
    %p54 = scmp.eq.s32.totalorder %s16, 0
    %p55 = por %p53, %p54
    %s56 = ssub.s32 %s18, %s25
    %s57 = ssub.s32 %s17, %s29
    %s58 = sor.u32 %s56, %s57
    %p59 = scmp.eq.s32.totalorder %s58, 0
    %s61 = sadd.s32 %s60, 1
    %s62 = scalar_select %p59, %s60, %s61
    %p65 = pneg %p59
    %p66 = scmp.eq.s32.totalorder %s10, 1
    %p67 = por %p65, %p66
    %p68 = scmp.ne.s32.totalorder %s60, %s63
    %p69 = scmp.eq.s32.totalorder %s10, 0
    %p70 = por %p68, %p69
    %p71 = scmp.ne.s32.totalorder %s60, %s63
    %p72 = scmp.eq.s32.totalorder %s15, 1
    %p73 = por %p71, %p72
    %p74 = scmp.ne.s32.totalorder %s63, %s64
    %p75 = scmp.eq.s32.totalorder %s15, 0
    %p76 = por %p74, %p75
    %p77 = scmp.ne.s32.totalorder %s63, %s64
    %p78 = scmp.eq.s32.totalorder %s16, 1
    %p79 = por %p77, %p78
    %p81 = scmp.ne.s32.totalorder %s64, %s80
    %p82 = scmp.eq.s32.totalorder %s16, 0
    %p83 = por %p81, %p82
    %s84 = ssub.s32 %s18, %s25
    %p85 = scmp.eq.s32.totalorder %s84, 0
    %s87 = sadd.s32 %s86, 1
    %s88 = scalar_select %p85, %s86, %s87
    %p91 = pneg %p85
    %p92 = scmp.eq.s32.totalorder %s10, 1
    %p93 = por %p91, %p92
    %p94 = scmp.ne.s32.totalorder %s86, %s89
    %p95 = scmp.eq.s32.totalorder %s10, 0
    %p96 = por %p94, %p95
    %p97 = scmp.ne.s32.totalorder %s86, %s89
    %p98 = scmp.eq.s32.totalorder %s15, 1
    %p99 = por %p97, %p98
    %p100 = scmp.ne.s32.totalorder %s89, %s90
    %p101 = scmp.eq.s32.totalorder %s15, 0
    %p102 = por %p100, %p101
    %p103 = scmp.ne.s32.totalorder %s89, %s90
    %p104 = scmp.eq.s32.totalorder %s16, 1
    %p105 = por %p103, %p104
    %p107 = scmp.ne.s32.totalorder %s90, %s106
    %p108 = scmp.eq.s32.totalorder %s16, 0
    %p109 = por %p107, %p108
    %s110 = ssub.s32 %s18, %s25
    %p111 = scmp.eq.s32.totalorder %s110, 0
    %s113 = sadd.s32 %s112, 1
    %s114 = scalar_select %p111, %s112, %s113
    %p117 = pneg %p111
    %p118 = scmp.eq.s32.totalorder %s10, 1
    %p119 = por %p117, %p118
    %p120 = scmp.ne.s32.totalorder %s112, %s115
    %p121 = scmp.eq.s32.totalorder %s10, 0
    %p122 = por %p120, %p121
    %p123 = scmp.ne.s32.totalorder %s112, %s115
    %p124 = scmp.eq.s32.totalorder %s15, 1
    %p125 = por %p123, %p124
    %p126 = scmp.ne.s32.totalorder %s115, %s116
    %p127 = scmp.eq.s32.totalorder %s15, 0
    %p128 = por %p126, %p127
    %p129 = scmp.ne.s32.totalorder %s115, %s116
    %p130 = scmp.eq.s32.totalorder %s16, 1
    %p131 = por %p129, %p130
    %p133 = scmp.ne.s32.totalorder %s116, %s132
    %p134 = scmp.eq.s32.totalorder %s16, 0
    %p135 = por %p133, %p134
    %s136 = ssub.s32 %s18, %s25
    %s137 = ssub.s32 %s17, %s29
    %s138 = sor.u32 %s136, %s137
    %p139 = scmp.eq.s32.totalorder %s138, 0
    %s141 = sadd.s32 %s140, 1
    %s142 = scalar_select %p139, %s140, %s141
    %p145 = pneg %p139
    %p146 = scmp.eq.s32.totalorder %s10, 1
    %p147 = por %p145, %p146
    %p148 = scmp.ne.s32.totalorder %s140, %s143
    %p149 = scmp.eq.s32.totalorder %s10, 0
    %p150 = por %p148, %p149
    %p151 = scmp.ne.s32.totalorder %s140, %s143
    %p152 = scmp.eq.s32.totalorder %s15, 1
    %p153 = por %p151, %p152
    %p154 = scmp.ne.s32.totalorder %s143, %s144
    %p155 = scmp.eq.s32.totalorder %s15, 0
    %p156 = por %p154, %p155
    %p157 = scmp.ne.s32.totalorder %s143, %s144
    %p158 = scmp.eq.s32.totalorder %s16, 1
    %p159 = por %p157, %p158
    %p161 = scmp.ne.s32.totalorder %s144, %s160
    %p162 = scmp.eq.s32.totalorder %s16, 0
    %p163 = por %p161, %p162
    %p164 = scmp.le.s32.totalorder 1, %s10
    %p165 = scmp.lt.s32.totalorder %s10, 3
    %p166 = pnand %p164, %p165
    %p167 = pneg %p166
    // Predicated region
    $region9: #{patch_moe_basic_block.5} parent=5 // pred_check
      _
    $region10: #{patch_moe_basic_block.5} parent=5 // pred_check_branch
      %169 = sbr.rel (%p166) target = $region12
    $region11: #{patch_moe_basic_block.5} parent=5 // pred_region
      %s170 = ssub.s32 %s10, 1
      // Predicated region
      $region13: #{patch_moe_basic_block.5} parent=11 // pred_check
        %p171 = pneg %p48
      $region14: #{patch_moe_basic_block.5} parent=11 // pred_check_branch
        %173 = sbr.rel (%p171) target = $region16
      $region15: #{patch_moe_basic_block.5} parent=11 // pred_region
        %s174 = smul.u32 4, %s19
        %p175 = scmp.lt.s32.totalorder %s174, 3
        %s176 = scalar_select %p175, %s174, 3
        %s177 = smul.addr %s176, 8
        %s178 = scalar_lea.vmem %s0, %s177
        %s179 = smul.u32 4, %s19
      $region16: #{patch_moe_basic_block.5} parent=11 // pred_fallthru
        _
    $region12: #{patch_moe_basic_block.5} parent=5 // pred_fallthru
      _
    %p180 = scmp.lt.s32.totalorder %s10, 2
    // Predicated region
    $region17: #{patch_moe_basic_block.5} parent=5 // pred_check
      %p181 = pneg %p180
    $region18: #{patch_moe_basic_block.5} parent=5 // pred_check_branch
      %183 = sbr.rel (%p181) target = $region20
    $region19: #{patch_moe_basic_block.5} parent=5 // pred_region
      // Predicated region
      $region21: #{patch_moe_basic_block.5} parent=19 // pred_check
        %p184 = pneg %p70
      $region22: #{patch_moe_basic_block.5} parent=19 // pred_check_branch
        %186 = sbr.rel (%p184) target = $region24
      $region23: #{patch_moe_basic_block.5} parent=19 // pred_region
        %s187 = smul.u32 4, %s17
        %p188 = scmp.lt.s32.totalorder %s18, 1
        %s189 = scalar_select %p188, %s18, 1
        %p190 = scmp.lt.s32.totalorder %s187, 3
        %s191 = scalar_select %p190, %s187, 3
        %s192 = smul.addr %s189, 8
        %s193 = sadd.s32 %s191, %s192
        %s194 = smul.addr %s193, 8
        %s195 = scalar_lea.vmem %s1, %s194
        %s196 = smul.u32 4, %s17
      $region24: #{patch_moe_basic_block.5} parent=19 // pred_fallthru
        _
      // Predicated region
      $region25: #{patch_moe_basic_block.5} parent=19 // pred_check
        %p197 = pneg %p96
      $region26: #{patch_moe_basic_block.5} parent=19 // pred_check_branch
        %199 = sbr.rel (%p197) target = $region28
      $region27: #{patch_moe_basic_block.5} parent=19 // pred_region
        %p200 = scmp.lt.s32.totalorder %s18, 1
        %s201 = scalar_select %p200, %s18, 1
        %s202 = smul.addr %s201, 8
        %s203 = scalar_lea.vmem %s2, %s202
      $region28: #{patch_moe_basic_block.5} parent=19 // pred_fallthru
        _
      // Predicated region
      $region29: #{patch_moe_basic_block.5} parent=19 // pred_check
        %p204 = pneg %p122
      $region30: #{patch_moe_basic_block.5} parent=19 // pred_check_branch
        %206 = sbr.rel (%p204) target = $region32
      $region31: #{patch_moe_basic_block.5} parent=19 // pred_region
        %p207 = scmp.lt.s32.totalorder %s18, 1
        %s208 = scalar_select %p207, %s18, 1
        %s209 = smul.addr %s208, 8
        %s210 = scalar_lea.vmem %s3, %s209
      $region32: #{patch_moe_basic_block.5} parent=19 // pred_fallthru
        _
    $region20: #{patch_moe_basic_block.5} parent=5 // pred_fallthru
      _
    %p211 = scmp.le.s32.totalorder 1, %s10
    %p212 = scmp.lt.s32.totalorder %s10, 3
    %p213 = pnand %p211, %p212
    %p214 = pneg %p213
    // Predicated region
    $region33: #{patch_moe_basic_block.5} parent=5 // pred_check
      _
    $region34: #{patch_moe_basic_block.5} parent=5 // pred_check_branch
      %216 = sbr.rel (%p213) target = $region36
    $region35: #{patch_moe_basic_block.5} parent=5 // pred_region
      %s217 = ssub.s32 %s10, 1
      %s218 = smul.u32 4, %s19
      %p219 = scmp.lt.s32.totalorder %s218, 3
      %s220 = scalar_select %p219, %s218, 3
      %s221 = smul.addr %s220, 8
      %s222 = scalar_lea.vmem %s0, %s221
      %p223 = pneg %p48
      %p224 = pneg %p45
      %s225 = smul.u32 4, %s19
      %p226 = scmp.lt.s32.totalorder %s20, 1
      %s227 = scalar_select %p226, %s20, 1
      %p228 = scmp.lt.s32.totalorder %s225, 3
      %s229 = scalar_select %p228, %s225, 3
      %s230 = smul.addr %s227, 8
      %s231 = sadd.s32 %s229, %s230
      %s232 = smul.addr %s231, 8
      %s233 = scalar_lea.vmem %s1, %s232
      %p234 = pneg %p76
      %p235 = pneg %p73
      %p236 = scmp.lt.s32.totalorder %s20, 1
      %s237 = scalar_select %p236, %s20, 1
      %s238 = smul.addr %s237, 8
      %s239 = scalar_lea.vmem %s2, %s238
      %p240 = pneg %p102
      %p241 = pneg %p99
      %p242 = scmp.lt.s32.totalorder %s20, 1
      %s243 = scalar_select %p242, %s20, 1
      %s244 = smul.addr %s243, 8
      %s245 = scalar_lea.vmem %s3, %s244
      %p246 = pneg %p128
      %p247 = pneg %p125
      %p248 = pneg %p156
      %p249 = pneg %p153
      %s250 = smul.u32 4, %s19
      %p251 = scmp.lt.s32.totalorder %s20, 1
      %s252 = scalar_select %p251, %s20, 1
      %p253 = scmp.lt.s32.totalorder %s250, 3
      %s254 = scalar_select %p253, %s250, 3
      %s255 = smul.addr %s252, 4
      %s256 = sadd.s32 %s254, %s255
      %s257 = smul.addr %s256, 8
      %s258 = scalar_lea.vmem %s4, %s257
      %s259 = smul.u32 4, %s19
      %p260 = scmp.lt.s32.totalorder %s259, 3
      %s261 = scalar_select %p260, %s259, 3
      %s262 = smul.addr %s261, 8
      %s263 = scalar_lea.vmem %s0, %s262
      %s264 = smul.u32 4, %s19
      %s265 = smul.u32 4, %s19
      %p266 = scmp.lt.s32.totalorder %s20, 1
      %s267 = scalar_select %p266, %s20, 1
      %p268 = scmp.lt.s32.totalorder %s265, 3
      %s269 = scalar_select %p268, %s265, 3
      %s270 = smul.addr %s267, 8
      %s271 = sadd.s32 %s269, %s270
      %s272 = smul.addr %s271, 8
      %s273 = scalar_lea.vmem %s1, %s272
      %s274 = smul.u32 4, %s19
      %p275 = scmp.lt.s32.totalorder %s20, 1
      %s276 = scalar_select %p275, %s20, 1
      %s277 = smul.addr %s276, 8
      %s278 = scalar_lea.vmem %s2, %s277
      %p279 = scmp.lt.s32.totalorder %s20, 1
      %s280 = scalar_select %p279, %s20, 1
      %s281 = smul.addr %s280, 8
      %s282 = scalar_lea.vmem %s3, %s281
      %s283 = smul.u32 4, %s19
      %p284 = scmp.lt.s32.totalorder %s20, 1
      %s285 = scalar_select %p284, %s20, 1
      %p286 = scmp.lt.s32.totalorder %s283, 3
      %s287 = scalar_select %p286, %s283, 3
      %s288 = smul.addr %s285, 4
      %s289 = sadd.s32 %s287, %s288
      %s290 = smul.addr %s289, 8
      %s291 = scalar_lea.vmem %s4, %s290
      %s292 = smul.u32 4, %s19
      %v293 = vld [vmem:[%s263] sm:$0xff]
      %v294 = vld [vmem:[%s263 + $0x8] sm:$0xff]
      %v295 = vld [vmem:[%s263 + $0x10] sm:$0xff]
      %v296 = vld [vmem:[%s263 + $0x18] sm:$0xff]
      %v297 = vld [vmem:[%s263 + $0x20] sm:$0xff]
      %v298 = vld [vmem:[%s263 + $0x28] sm:$0xff]
      %v299 = vld [vmem:[%s263 + $0x30] sm:$0xff]
      %v300 = vld [vmem:[%s263 + $0x38] sm:$0xff]
      %v301 = vld [vmem:[%s263 + $0x40] sm:$0xff]
      %v302 = vld [vmem:[%s263 + $0x48] sm:$0xff]
      %v303 = vld [vmem:[%s263 + $0x50] sm:$0xff]
      %v304 = vld [vmem:[%s263 + $0x58] sm:$0xff]
      %v305 = vld [vmem:[%s263 + $0x60] sm:$0xff]
      %v306 = vld [vmem:[%s263 + $0x68] sm:$0xff]
      %v307 = vld [vmem:[%s263 + $0x70] sm:$0xff]
      %v308 = vld [vmem:[%s263 + $0x78] sm:$0xff]
      %v309 = vld [vmem:[%s263 + $0x80] sm:$0xff]
      %v310 = vld [vmem:[%s263 + $0x88] sm:$0xff]
      %v311 = vld [vmem:[%s263 + $0x90] sm:$0xff]
      %v312 = vld [vmem:[%s263 + $0x98] sm:$0xff]
      %v313 = vld [vmem:[%s263 + $0xa0] sm:$0xff]
      %v314 = vld [vmem:[%s263 + $0xa8] sm:$0xff]
      %v315 = vld [vmem:[%s263 + $0xb0] sm:$0xff]
      %v316 = vld [vmem:[%s263 + $0xb8] sm:$0xff]
      %v317 = vld [vmem:[%s263 + $0xc0] sm:$0xff]
      %v318 = vld [vmem:[%s263 + $0xc8] sm:$0xff]
      %v319 = vld [vmem:[%s263 + $0xd0] sm:$0xff]
      %v320 = vld [vmem:[%s263 + $0xd8] sm:$0xff]
      %v321 = vld [vmem:[%s263 + $0xe0] sm:$0xff]
      %v322 = vld [vmem:[%s263 + $0xe8] sm:$0xff]
      %v323 = vld [vmem:[%s263 + $0xf0] sm:$0xff]
      %v324 = vld [vmem:[%s263 + $0xf8] sm:$0xff]
      %v325 = vld [vmem:[%s263 + $0x100] sm:$0xff]
      %v326 = vld [vmem:[%s263 + $0x108] sm:$0xff]
      %v327 = vld [vmem:[%s263 + $0x110] sm:$0xff]
      %v328 = vld [vmem:[%s263 + $0x118] sm:$0xff]
      %v329 = vld [vmem:[%s273] sm:$0xff]
      %v330 = vld [vmem:[%s273 + $0x8] sm:$0xff]
      %v331 = vld [vmem:[%s273 + $0x10] sm:$0xff]
      %v332 = vld [vmem:[%s273 + $0x18] sm:$0xff]
      %v333 = vld [vmem:[%s273 + $0x20] sm:$0x1]
      %v334 = vld [vmem:[%s273 + $0x28] sm:$0x1]
      %v335 = vld [vmem:[%s273 + $0x30] sm:$0x1]
      %v336 = vld [vmem:[%s273 + $0x38] sm:$0x1]
      %v345 = vrot.slane %v330, 7
      %v346 = vrot.slane %v331, 6
      %v347 = vrot.slane %v332, 5
      %v348 = vrot.slane %v334, 7
      %v349 = vrot.slane %v335, 6
      %v350 = vrot.slane %v336, 5
      %vm351 = vcmask 1040384
      %v352 = vsel %vm351, %v329, %v345
      %vm353 = vcmask 1042434
      %v354 = vsel %vm353, %v346, %v347
      %vm355 = vcmask 1041408
      %v356 = vsel %vm355, %v352, %v354
      %vm357 = vcmask 1041409
      %v358 = vsel %vm357, %v329, %v345
      %vm359 = vcmask 1043459
      %v360 = vsel %vm359, %v346, %v347
      %vm361 = vcmask 1042433
      %v362 = vsel %vm361, %v358, %v360
      %v363 = vrot.slane %v362, 1
      %v364 = vsel %vm353, %v329, %v345
      %vm365 = vcmask 1044484
      %v366 = vsel %vm365, %v346, %v347
      %vm367 = vcmask 1043458
      %v368 = vsel %vm367, %v364, %v366
      %v369 = vrot.slane %v368, 2
      %v370 = vsel %vm359, %v329, %v345
      %vm371 = vcmask 1045509
      %v372 = vsel %vm371, %v346, %v347
      %vm373 = vcmask 1044483
      %v374 = vsel %vm373, %v370, %v372
      %v375 = vrot.slane %v374, 3
      %v376 = vsel %vm365, %v329, %v345
      %vm377 = vcmask 1046534
      %v378 = vsel %vm377, %v346, %v347
      %vm379 = vcmask 1045508
      %v380 = vsel %vm379, %v376, %v378
      %v381 = vrot.slane %v380, 4
      %v382 = vsel %vm371, %v329, %v345
      %vm383 = vcmask 1046528
      %v384 = vsel %vm383, %v347, %v346
      %vm385 = vcmask 1046533
      %v386 = vsel %vm385, %v382, %v384
      %v387 = vrot.slane %v386, 5
      %v388 = vsel %vm377, %v329, %v345
      %v389 = vsel %vm351, %v346, %v347
      %vm390 = vcmask 1045504
      %v391 = vsel %vm390, %v389, %v388
      %v392 = vrot.slane %v391, 6
      %v393 = vsel %vm383, %v345, %v329
      %v394 = vsel %vm357, %v346, %v347
      %vm395 = vcmask 1046529
      %v396 = vsel %vm395, %v394, %v393
      %v397 = vrot.slane %v396, 7
      %v398 = vsel %vm351, %v333, %v348
      %v399 = vsel %vm353, %v349, %v350
      %v400 = vsel %vm355, %v398, %v399
      %v401 = vperm.slane %v356, 0
      %v402 = vperm.slane %v356, 1
      %v403 = vperm.slane %v356, 2
      %v404 = vperm.slane %v356, 3
      %v405 = vperm.slane %v363, 0
      %v406 = vperm.slane %v363, 1
      %v407 = vperm.slane %v363, 2
      %v408 = vperm.slane %v363, 3
      %v409 = vperm.slane %v369, 0
      %v410 = vperm.slane %v369, 1
      %v411 = vperm.slane %v369, 2
      %v412 = vperm.slane %v369, 3
      %v413 = vperm.slane %v375, 0
      %v414 = vperm.slane %v375, 1
      %v415 = vperm.slane %v375, 2
      %v416 = vperm.slane %v375, 3
      %v417 = vperm.slane %v381, 0
      %v418 = vperm.slane %v381, 1
      %v419 = vperm.slane %v381, 2
      %v420 = vperm.slane %v381, 3
      %v421 = vperm.slane %v387, 0
      %v422 = vperm.slane %v387, 1
      %v423 = vperm.slane %v387, 2
      %v424 = vperm.slane %v387, 3
      %v425 = vperm.slane %v392, 0
      %v426 = vperm.slane %v392, 1
      %v427 = vperm.slane %v392, 2
      %v428 = vperm.slane %v392, 3
      %v429 = vperm.slane %v397, 0
      %v430 = vperm.slane %v397, 1
      %v431 = vperm.slane %v397, 2
      %v432 = vperm.slane %v397, 3
      %v433 = vperm.slane %v400, 0
      %v434 = vperm.slane %v400, 1
      %v435 = vperm.slane %v400, 2
      %v436 = vperm.slane %v400, 3
      %v473 = vmul.f32 %v293, %v401
      %v474 = vmul.f32 %v294, %v402
      %v475 = vmul.f32 %v295, %v403
      %v476 = vmul.f32 %v296, %v404
      %v477 = vmul.f32 %v297, %v405
      %v478 = vmul.f32 %v298, %v406
      %v479 = vmul.f32 %v299, %v407
      %v480 = vmul.f32 %v300, %v408
      %v481 = vmul.f32 %v301, %v409
      %v482 = vmul.f32 %v302, %v410
      %v483 = vmul.f32 %v303, %v411
      %v484 = vmul.f32 %v304, %v412
      %v485 = vmul.f32 %v305, %v413
      %v486 = vmul.f32 %v306, %v414
      %v487 = vmul.f32 %v307, %v415
      %v488 = vmul.f32 %v308, %v416
      %v489 = vmul.f32 %v309, %v417
      %v490 = vmul.f32 %v310, %v418
      %v491 = vmul.f32 %v311, %v419
      %v492 = vmul.f32 %v312, %v420
      %v493 = vmul.f32 %v313, %v421
      %v494 = vmul.f32 %v314, %v422
      %v495 = vmul.f32 %v315, %v423
      %v496 = vmul.f32 %v316, %v424
      %v497 = vmul.f32 %v317, %v425
      %v498 = vmul.f32 %v318, %v426
      %v499 = vmul.f32 %v319, %v427
      %v500 = vmul.f32 %v320, %v428
      %v501 = vmul.f32 %v321, %v429
      %v502 = vmul.f32 %v322, %v430
      %v503 = vmul.f32 %v323, %v431
      %v504 = vmul.f32 %v324, %v432
      %v505 = vmul.f32 %v325, %v433
      %v506 = vmul.f32 %v326, %v434
      %v507 = vmul.f32 %v327, %v435
      %v508 = vmul.f32 %v328, %v436
      %v509 = vld [vmem:[%s278] sm:$0xff]
      %v510 = vld [vmem:[%s282] sm:$0xff]
      %512 = vset.pattern.permute.xlu0 0
      %513 = vperm.xlu0 %512, %v510
      %v514 = vpop.permute.xlu0 %513
      %vm516 = vcmask 588800
      %v518 = vsel %vm516, %v509, 0
      %520 = vmatpush.msra.mxu0 0.0
      %521 = vmatpush.msra.mxu0 0.0
      %522 = vmatpush.msra.mxu0 0.0
      %523 = vmatpush.msra.mxu0 0.0
      %524 = vmatpush.msra.mxu0 0.0
      %525 = vmatpush.msra.mxu0 0.0
      %526 = vmatpush.msra.mxu0 0.0
      %527 = vmatpush.msra.mxu0 %v505
      %528 = vmatpush.msra.mxu0 %v501
      %529 = vmatpush.msra.mxu0 %v497
      %530 = vmatpush.msra.mxu0 %v493
      %531 = vmatpush.msra.mxu0 %v489
      %532 = vmatpush.msra.mxu0 %v485
      %533 = vmatpush.msra.mxu0 %v481
      %534 = vmatpush.msra.mxu0 %v477
      %535 = vmatpush.msra.mxu0 %v473
      %536 = vmatmul.f32.gmra.mxu0 %v518
      %v537 = vpop.f32.mrf.mxu0
      %v538 = vadd.f32 %v514, %v537
      %539 = vdwg.mxu0
      %540 = vmatpush.msra.mxu0 0.0
      %541 = vmatpush.msra.mxu0 0.0
      %542 = vmatpush.msra.mxu0 0.0
      %543 = vmatpush.msra.mxu0 0.0
      %544 = vmatpush.msra.mxu0 0.0
      %545 = vmatpush.msra.mxu0 0.0
      %546 = vmatpush.msra.mxu0 0.0
      %547 = vmatpush.msra.mxu0 %v506
      %548 = vmatpush.msra.mxu0 %v502
      %549 = vmatpush.msra.mxu0 %v498
      %550 = vmatpush.msra.mxu0 %v494
      %551 = vmatpush.msra.mxu0 %v490
      %552 = vmatpush.msra.mxu0 %v486
      %553 = vmatpush.msra.mxu0 %v482
      %554 = vmatpush.msra.mxu0 %v478
      %555 = vmatpush.msra.mxu0 %v474
      %556 = vmatmul.f32.gmra.mxu0 %v518
      %v557 = vpop.f32.mrf.mxu0
      %v558 = vadd.f32 %v514, %v557
      %559 = vdwg.mxu0
      %560 = vmatpush.msra.mxu0 0.0
      %561 = vmatpush.msra.mxu0 0.0
      %562 = vmatpush.msra.mxu0 0.0
      %563 = vmatpush.msra.mxu0 0.0
      %564 = vmatpush.msra.mxu0 0.0
      %565 = vmatpush.msra.mxu0 0.0
      %566 = vmatpush.msra.mxu0 0.0
      %567 = vmatpush.msra.mxu0 %v507
      %568 = vmatpush.msra.mxu0 %v503
      %569 = vmatpush.msra.mxu0 %v499
      %570 = vmatpush.msra.mxu0 %v495
      %571 = vmatpush.msra.mxu0 %v491
      %572 = vmatpush.msra.mxu0 %v487
      %573 = vmatpush.msra.mxu0 %v483
      %574 = vmatpush.msra.mxu0 %v479
      %575 = vmatpush.msra.mxu0 %v475
      %576 = vmatmul.f32.gmra.mxu0 %v518
      %v577 = vpop.f32.mrf.mxu0
      %v578 = vadd.f32 %v514, %v577
      %579 = vdwg.mxu0
      %580 = vmatpush.msra.mxu0 0.0
      %581 = vmatpush.msra.mxu0 0.0
      %582 = vmatpush.msra.mxu0 0.0
      %583 = vmatpush.msra.mxu0 0.0
      %584 = vmatpush.msra.mxu0 0.0
      %585 = vmatpush.msra.mxu0 0.0
      %586 = vmatpush.msra.mxu0 0.0
      %587 = vmatpush.msra.mxu0 %v508
      %588 = vmatpush.msra.mxu0 %v504
      %589 = vmatpush.msra.mxu0 %v500
      %590 = vmatpush.msra.mxu0 %v496
      %591 = vmatpush.msra.mxu0 %v492
      %592 = vmatpush.msra.mxu0 %v488
      %593 = vmatpush.msra.mxu0 %v484
      %594 = vmatpush.msra.mxu0 %v480
      %595 = vmatpush.msra.mxu0 %v476
      %596 = vmatmul.f32.gmra.mxu0 %v518
      %v597 = vpop.f32.mrf.mxu0
      %v598 = vadd.f32 %v514, %v597
      %599 = vdwg.mxu0
      %600 = vst [vmem:[%s291] sm:$0xff] %v538
      %601 = vst [vmem:[%s291 + $0x8] sm:$0xff] %v558
      %602 = vst [vmem:[%s291 + $0x10] sm:$0xff] %v578
      %603 = vst [vmem:[%s291 + $0x18] sm:$0xff] %v598
      %s604 = smul.u32 4, %s19
      %p605 = scmp.lt.s32.totalorder %s20, 1
      %s606 = scalar_select %p605, %s20, 1
      %p607 = scmp.lt.s32.totalorder %s604, 3
      %s608 = scalar_select %p607, %s604, 3
      %s609 = smul.addr %s606, 4
      %s610 = sadd.s32 %s608, %s609
      %s611 = smul.addr %s610, 8
      %s612 = scalar_lea.vmem %s4, %s611
      // Predicated region
      $region37: #{patch_moe_basic_block.5} parent=35 // pred_check
        %p613 = pneg %p153
      $region38: #{patch_moe_basic_block.5} parent=35 // pred_check_branch
        %615 = sbr.rel (%p613) target = $region40
      $region39: #{patch_moe_basic_block.5} parent=35 // pred_region
        %s616 = smul.u32 4, %s19
      $region40: #{patch_moe_basic_block.5} parent=35 // pred_fallthru
        _
    $region36: #{patch_moe_basic_block.5} parent=5 // pred_fallthru
      _
    %p617 = scmp.le.s32.totalorder 2, %s10
    // Predicated region
    $region41: #{patch_moe_basic_block.5} parent=5 // pred_check
      %p618 = pneg %p617
    $region42: #{patch_moe_basic_block.5} parent=5 // pred_check_branch
      %620 = sbr.rel (%p618) target = $region44
    $region43: #{patch_moe_basic_block.5} parent=5 // pred_region
      %s621 = ssub.s32 %s10, 2
      // Predicated region
      $region45: #{patch_moe_basic_block.5} parent=43 // pred_check
        %p622 = pneg %p159
      $region46: #{patch_moe_basic_block.5} parent=43 // pred_check_branch
        %624 = sbr.rel (%p622) target = $region48
      $region47: #{patch_moe_basic_block.5} parent=43 // pred_region
        %s625 = smul.u32 4, %s21
        %p626 = scmp.lt.s32.totalorder %s22, 1
        %s627 = scalar_select %p626, %s22, 1
        %p628 = scmp.lt.s32.totalorder %s625, 3
        %s629 = scalar_select %p628, %s625, 3
        %s630 = smul.addr %s627, 4
        %s631 = sadd.s32 %s629, %s630
        %s632 = smul.addr %s631, 8
        %s633 = scalar_lea.vmem %s4, %s632
      $region48: #{patch_moe_basic_block.5} parent=43 // pred_fallthru
        _
    $region44: #{patch_moe_basic_block.5} parent=5 // pred_fallthru
      _
  $region6: #{patch_moe_basic_block.5} parent=0 // loop_footer
    %s14 = sadd.s32 1, %s10
  $region7: #{patch_moe_basic_block.5} parent=0 // loop_footer_branch
    %9 = sbr.rel target = $region3
  $region8: #{patch_moe_basic_block.5} parent=0 // loop_exit
    _

// kernel: patch_moe_basic_block.7
$region0: #{patch_moe_basic_block.7}
  #allocation0 [shape = 'u32[]', space=smem, size = 0x4, offset = 0x4, fixed_abs, tag = 'smem constant byte address 0x4 - core index']
  #allocation1 [shape = 'u32[72,128]{1,0:T(1,128)}', space=vmem, size = 0x9000, scoped, tag = 'internal scratch']
  %s0 = inlined_call_operand.vmem [shape: f32[2,8,512], index: 0, kind: input, shape index: {}]
  %s1 = inlined_call_operand.vmem [shape: f32[2,8,1], index: 1, kind: input, shape index: {}]
  %s2 = inlined_call_operand.vmem [shape: f32[2,8,1], index: 2, kind: input, shape index: {}]
  %s3 = inlined_call_operand.vmem [shape: f32[1,8,512], index: 3, kind: input, shape index: {}]
  %s4 = inlined_call_operand.vmem [shape: f32[8,512], index: 4, kind: output, shape index: {}]
  %s5 = sld [smem:[#allocation0]]
  $region53: #{patch_moe_basic_block.7} parent=0
    _
  %s7 = ssub.s32 1, %s5
  %s8 = scalar_select 0, %s7, %s5
  loop: start=0, step=1, limit=4
  $region2: #{patch_moe_basic_block.7} parent=0 // loop_pre_header
    _
  $region3: #{patch_moe_basic_block.7} parent=0 // loop_header
    %s10 = sphi 0, %s14
    %p11 = scmp.ge.s32.totalorder %s10, 4
    %s17 = sphi 0, %s29
    %s18 = sphi 0, %s25
    %s19 = sphi 0, %s17
    %s20 = sphi 0, %s18
    %s21 = sphi 0, %s19
    %s22 = sphi 0, %s20
    %s34 = sphi 0, %s36
    %s37 = sphi 0, %s34
    %s38 = sphi 0, %s37
    %s54 = sphi 0, %s38
    %s60 = sphi 0, %s62
    %s63 = sphi 0, %s60
    %s64 = sphi 0, %s63
    %s80 = sphi 0, %s64
    %s86 = sphi 0, %s88
    %s89 = sphi 0, %s86
    %s90 = sphi 0, %s89
    %s106 = sphi 0, %s90
    %s112 = sphi 0, %s114
    %s115 = sphi 0, %s112
    %s116 = sphi 0, %s115
    %s132 = sphi 0, %s116
    %s138 = sphi 0, %s140
    %s141 = sphi 0, %s138
    %s142 = sphi 0, %s141
    %s158 = sphi 0, %s142
  $region4: #{patch_moe_basic_block.7} parent=0 // loop_header_branch
    %13 = sbr.rel (%p11) target = $region8
  $region5: #{patch_moe_basic_block.7} parent=0 // loop_body
    %s15 = ssub.s32 %s10, 1
    %s16 = ssub.s32 %s10, 2
    %s23 = sadd.s32 1, %s18
    %p24 = scmp.ge.s32.totalorder %s23, 2
    %s25 = scalar_select %p24, 0, %s23
    %s26 = sadd.s32 1, %s17
    %s27 = scalar_select %p24, %s26, %s17
    %p28 = scmp.ge.s32.totalorder %s27, 1
    %s29 = scalar_select %p28, 0, %s27
    %s30 = ssub.s32 %s18, %s25
    %s31 = ssub.s32 %s17, %s29
    %s32 = sor.u32 %s30, %s31
    %p33 = scmp.eq.s32.totalorder %s32, 0
    %s35 = sadd.s32 %s34, 1
    %s36 = scalar_select %p33, %s34, %s35
    %p39 = pneg %p33
    %p40 = scmp.eq.s32.totalorder %s10, 1
    %p41 = por %p39, %p40
    %p42 = scmp.ne.s32.totalorder %s34, %s37
    %p43 = scmp.eq.s32.totalorder %s10, 0
    %p44 = por %p42, %p43
    %p45 = scmp.ne.s32.totalorder %s34, %s37
    %p46 = scmp.eq.s32.totalorder %s15, 1
    %p47 = por %p45, %p46
    %p48 = scmp.ne.s32.totalorder %s37, %s38
    %p49 = scmp.eq.s32.totalorder %s15, 0
    %p50 = por %p48, %p49
    %p51 = scmp.ne.s32.totalorder %s37, %s38
    %p52 = scmp.eq.s32.totalorder %s16, 1
    %p53 = por %p51, %p52
    %p55 = scmp.ne.s32.totalorder %s38, %s54
    %p56 = scmp.eq.s32.totalorder %s16, 0
    %p57 = por %p55, %p56
    %s58 = ssub.s32 %s18, %s25
    %p59 = scmp.eq.s32.totalorder %s58, 0
    %s61 = sadd.s32 %s60, 1
    %s62 = scalar_select %p59, %s60, %s61
    %p65 = pneg %p59
    %p66 = scmp.eq.s32.totalorder %s10, 1
    %p67 = por %p65, %p66
    %p68 = scmp.ne.s32.totalorder %s60, %s63
    %p69 = scmp.eq.s32.totalorder %s10, 0
    %p70 = por %p68, %p69
    %p71 = scmp.ne.s32.totalorder %s60, %s63
    %p72 = scmp.eq.s32.totalorder %s15, 1
    %p73 = por %p71, %p72
    %p74 = scmp.ne.s32.totalorder %s63, %s64
    %p75 = scmp.eq.s32.totalorder %s15, 0
    %p76 = por %p74, %p75
    %p77 = scmp.ne.s32.totalorder %s63, %s64
    %p78 = scmp.eq.s32.totalorder %s16, 1
    %p79 = por %p77, %p78
    %p81 = scmp.ne.s32.totalorder %s64, %s80
    %p82 = scmp.eq.s32.totalorder %s16, 0
    %p83 = por %p81, %p82
    %s84 = ssub.s32 %s18, %s25
    %p85 = scmp.eq.s32.totalorder %s84, 0
    %s87 = sadd.s32 %s86, 1
    %s88 = scalar_select %p85, %s86, %s87
    %p91 = pneg %p85
    %p92 = scmp.eq.s32.totalorder %s10, 1
    %p93 = por %p91, %p92
    %p94 = scmp.ne.s32.totalorder %s86, %s89
    %p95 = scmp.eq.s32.totalorder %s10, 0
    %p96 = por %p94, %p95
    %p97 = scmp.ne.s32.totalorder %s86, %s89
    %p98 = scmp.eq.s32.totalorder %s15, 1
    %p99 = por %p97, %p98
    %p100 = scmp.ne.s32.totalorder %s89, %s90
    %p101 = scmp.eq.s32.totalorder %s15, 0
    %p102 = por %p100, %p101
    %p103 = scmp.ne.s32.totalorder %s89, %s90
    %p104 = scmp.eq.s32.totalorder %s16, 1
    %p105 = por %p103, %p104
    %p107 = scmp.ne.s32.totalorder %s90, %s106
    %p108 = scmp.eq.s32.totalorder %s16, 0
    %p109 = por %p107, %p108
    %s110 = ssub.s32 %s17, %s29
    %p111 = scmp.eq.s32.totalorder %s110, 0
    %s113 = sadd.s32 %s112, 1
    %s114 = scalar_select %p111, %s112, %s113
    %p117 = pneg %p111
    %p118 = scmp.eq.s32.totalorder %s10, 1
    %p119 = por %p117, %p118
    %p120 = scmp.ne.s32.totalorder %s112, %s115
    %p121 = scmp.eq.s32.totalorder %s10, 0
    %p122 = por %p120, %p121
    %p123 = scmp.ne.s32.totalorder %s112, %s115
    %p124 = scmp.eq.s32.totalorder %s15, 1
    %p125 = por %p123, %p124
    %p126 = scmp.ne.s32.totalorder %s115, %s116
    %p127 = scmp.eq.s32.totalorder %s15, 0
    %p128 = por %p126, %p127
    %p129 = scmp.ne.s32.totalorder %s115, %s116
    %p130 = scmp.eq.s32.totalorder %s16, 1
    %p131 = por %p129, %p130
    %p133 = scmp.ne.s32.totalorder %s116, %s132
    %p134 = scmp.eq.s32.totalorder %s16, 0
    %p135 = por %p133, %p134
    %s136 = ssub.s32 %s17, %s29
    %p137 = scmp.eq.s32.totalorder %s136, 0
    %s139 = sadd.s32 %s138, 1
    %s140 = scalar_select %p137, %s138, %s139
    %p143 = pneg %p137
    %p144 = scmp.eq.s32.totalorder %s10, 1
    %p145 = por %p143, %p144
    %p146 = scmp.ne.s32.totalorder %s138, %s141
    %p147 = scmp.eq.s32.totalorder %s10, 0
    %p148 = por %p146, %p147
    %p149 = scmp.ne.s32.totalorder %s138, %s141
    %p150 = scmp.eq.s32.totalorder %s15, 1
    %p151 = por %p149, %p150
    %p152 = scmp.ne.s32.totalorder %s141, %s142
    %p153 = scmp.eq.s32.totalorder %s15, 0
    %p154 = por %p152, %p153
    %p155 = scmp.ne.s32.totalorder %s141, %s142
    %p156 = scmp.eq.s32.totalorder %s16, 1
    %p157 = por %p155, %p156
    %p159 = scmp.ne.s32.totalorder %s142, %s158
    %p160 = scmp.eq.s32.totalorder %s16, 0
    %p161 = por %p159, %p160
    %p162 = scmp.le.s32.totalorder 1, %s10
    %p163 = scmp.lt.s32.totalorder %s10, 3
    %p164 = pnand %p162, %p163
    %p165 = pneg %p164
    // Predicated region
    $region9: #{patch_moe_basic_block.7} parent=5 // pred_check
      _
    $region10: #{patch_moe_basic_block.7} parent=5 // pred_check_branch
      %167 = sbr.rel (%p164) target = $region12
    $region11: #{patch_moe_basic_block.7} parent=5 // pred_region
      %s168 = ssub.s32 %s10, 1
      // Predicated region
      $region13: #{patch_moe_basic_block.7} parent=11 // pred_check
        %p169 = pneg %p128
      $region14: #{patch_moe_basic_block.7} parent=11 // pred_check_branch
        %171 = sbr.rel (%p169) target = $region16
      $region15: #{patch_moe_basic_block.7} parent=11 // pred_region
        %s172 = smul.u32 4, %s19
        %p173 = scmp.lt.s32.totalorder %s172, 3
        %s174 = scalar_select %p173, %s172, 3
        %s175 = smul.addr %s174, 8
        %s176 = scalar_lea.vmem %s3, %s175
        %s177 = smul.u32 4, %s19
      $region16: #{patch_moe_basic_block.7} parent=11 // pred_fallthru
        _
    $region12: #{patch_moe_basic_block.7} parent=5 // pred_fallthru
      _
    %p178 = scmp.lt.s32.totalorder %s10, 2
    // Predicated region
    $region17: #{patch_moe_basic_block.7} parent=5 // pred_check
      %p179 = pneg %p178
    $region18: #{patch_moe_basic_block.7} parent=5 // pred_check_branch
      %181 = sbr.rel (%p179) target = $region20
    $region19: #{patch_moe_basic_block.7} parent=5 // pred_region
      // Predicated region
      $region21: #{patch_moe_basic_block.7} parent=19 // pred_check
        %p182 = pneg %p44
      $region22: #{patch_moe_basic_block.7} parent=19 // pred_check_branch
        %184 = sbr.rel (%p182) target = $region24
      $region23: #{patch_moe_basic_block.7} parent=19 // pred_region
        %s185 = smul.u32 4, %s17
        %p186 = scmp.lt.s32.totalorder %s18, 1
        %s187 = scalar_select %p186, %s18, 1
        %p188 = scmp.lt.s32.totalorder %s185, 3
        %s189 = scalar_select %p188, %s185, 3
        %s190 = smul.addr %s187, 4
        %s191 = sadd.s32 %s189, %s190
        %s192 = smul.addr %s191, 8
        %s193 = scalar_lea.vmem %s0, %s192
        %s194 = smul.u32 4, %s17
      $region24: #{patch_moe_basic_block.7} parent=19 // pred_fallthru
        _
      // Predicated region
      $region25: #{patch_moe_basic_block.7} parent=19 // pred_check
        %p195 = pneg %p70
      $region26: #{patch_moe_basic_block.7} parent=19 // pred_check_branch
        %197 = sbr.rel (%p195) target = $region28
      $region27: #{patch_moe_basic_block.7} parent=19 // pred_region
        %p198 = scmp.lt.s32.totalorder %s18, 1
        %s199 = scalar_select %p198, %s18, 1
        %s200 = smul.addr %s199, 8
        %s201 = scalar_lea.vmem %s1, %s200
      $region28: #{patch_moe_basic_block.7} parent=19 // pred_fallthru
        _
      // Predicated region
      $region29: #{patch_moe_basic_block.7} parent=19 // pred_check
        %p202 = pneg %p96
      $region30: #{patch_moe_basic_block.7} parent=19 // pred_check_branch
        %204 = sbr.rel (%p202) target = $region32
      $region31: #{patch_moe_basic_block.7} parent=19 // pred_region
        %p205 = scmp.lt.s32.totalorder %s18, 1
        %s206 = scalar_select %p205, %s18, 1
        %s207 = smul.addr %s206, 8
        %s208 = scalar_lea.vmem %s2, %s207
      $region32: #{patch_moe_basic_block.7} parent=19 // pred_fallthru
        _
    $region20: #{patch_moe_basic_block.7} parent=5 // pred_fallthru
      _
    %p209 = scmp.le.s32.totalorder 1, %s10
    %p210 = scmp.lt.s32.totalorder %s10, 3
    %p211 = pnand %p209, %p210
    %p212 = pneg %p211
    // Predicated region
    $region33: #{patch_moe_basic_block.7} parent=5 // pred_check
      _
    $region34: #{patch_moe_basic_block.7} parent=5 // pred_check_branch
      %214 = sbr.rel (%p211) target = $region36
    $region35: #{patch_moe_basic_block.7} parent=5 // pred_region
      %s215 = ssub.s32 %s10, 1
      %s216 = smul.u32 4, %s19
      %p217 = scmp.lt.s32.totalorder %s20, 1
      %s218 = scalar_select %p217, %s20, 1
      %p219 = scmp.lt.s32.totalorder %s216, 3
      %s220 = scalar_select %p219, %s216, 3
      %s221 = smul.addr %s218, 4
      %s222 = sadd.s32 %s220, %s221
      %s223 = smul.addr %s222, 8
      %s224 = scalar_lea.vmem %s0, %s223
      %p225 = pneg %p50
      %p226 = pneg %p47
      %p227 = scmp.lt.s32.totalorder %s20, 1
      %s228 = scalar_select %p227, %s20, 1
      %s229 = smul.addr %s228, 8
      %s230 = scalar_lea.vmem %s1, %s229
      %p231 = pneg %p76
      %p232 = pneg %p73
      %p233 = scmp.lt.s32.totalorder %s20, 1
      %s234 = scalar_select %p233, %s20, 1
      %s235 = smul.addr %s234, 8
      %s236 = scalar_lea.vmem %s2, %s235
      %p237 = pneg %p102
      %p238 = pneg %p99
      %s239 = smul.u32 4, %s19
      %p240 = scmp.lt.s32.totalorder %s239, 3
      %s241 = scalar_select %p240, %s239, 3
      %s242 = smul.addr %s241, 8
      %s243 = scalar_lea.vmem %s3, %s242
      %p244 = pneg %p128
      %p245 = pneg %p125
      %p246 = pneg %p154
      %p247 = pneg %p151
      %s248 = smul.u32 4, %s19
      %p249 = scmp.lt.s32.totalorder %s248, 3
      %s250 = scalar_select %p249, %s248, 3
      %s251 = smul.addr %s250, 8
      %s252 = scalar_lea.vmem %s4, %s251
      %s253 = smul.u32 4, %s19
      %p254 = scmp.lt.s32.totalorder %s20, 1
      %s255 = scalar_select %p254, %s20, 1
      %p256 = scmp.lt.s32.totalorder %s253, 3
      %s257 = scalar_select %p256, %s253, 3
      %s258 = smul.addr %s255, 4
      %s259 = sadd.s32 %s257, %s258
      %s260 = smul.addr %s259, 8
      %s261 = scalar_lea.vmem %s0, %s260
      %s262 = smul.u32 4, %s19
      %p263 = scmp.lt.s32.totalorder %s20, 1
      %s264 = scalar_select %p263, %s20, 1
      %s265 = smul.addr %s264, 8
      %s266 = scalar_lea.vmem %s1, %s265
      %p267 = scmp.lt.s32.totalorder %s20, 1
      %s268 = scalar_select %p267, %s20, 1
      %s269 = smul.addr %s268, 8
      %s270 = scalar_lea.vmem %s2, %s269
      %s271 = smul.u32 4, %s19
      %p272 = scmp.lt.s32.totalorder %s271, 3
      %s273 = scalar_select %p272, %s271, 3
      %s274 = smul.addr %s273, 8
      %s275 = scalar_lea.vmem %s3, %s274
      %s276 = smul.u32 4, %s19
      %s277 = smul.u32 4, %s19
      %p278 = scmp.lt.s32.totalorder %s277, 3
      %s279 = scalar_select %p278, %s277, 3
      %s280 = smul.addr %s279, 8
      %s281 = scalar_lea.vmem %s4, %s280
      %s282 = smul.u32 4, %s19
      %p283 = scmp.eq.s32.totalorder %s20, 0
      // Predicated region
      $region37: #{patch_moe_basic_block.7} parent=35 // pred_check
        %p284 = pneg %p283
      $region38: #{patch_moe_basic_block.7} parent=35 // pred_check_branch
        %286 = sbr.rel (%p284) target = $region40
      $region39: #{patch_moe_basic_block.7} parent=35 // pred_region
        %287 = vst [vmem:[%s281] sm:$0xff] 0.0
        %288 = vst [vmem:[%s281 + $0x8] sm:$0xff] 0.0
        %289 = vst [vmem:[%s281 + $0x10] sm:$0xff] 0.0
        %290 = vst [vmem:[%s281 + $0x18] sm:$0xff] 0.0
      $region40: #{patch_moe_basic_block.7} parent=35 // pred_fallthru
        _
      %v291 = vld [vmem:[%s261] sm:$0xff]
      %v292 = vld [vmem:[%s261 + $0x8] sm:$0xff]
      %v293 = vld [vmem:[%s261 + $0x10] sm:$0xff]
      %v294 = vld [vmem:[%s261 + $0x18] sm:$0xff]
      %v295 = vld [vmem:[%s266] sm:$0xff]
      %297 = vset.pattern.permute.xlu0 0
      %298 = vperm.xlu0 %297, %v295
      %v299 = vpop.permute.xlu0 %298
      %v301 = vmul.f32 %v291, %v299
      %v302 = vmul.f32 %v292, %v299
      %v303 = vmul.f32 %v293, %v299
      %v304 = vmul.f32 %v294, %v299
      %v305 = vld [vmem:[%s270] sm:$0xff]
      %307 = vset.pattern.permute.xlu0 0
      %308 = vperm.xlu0 %307, %v305
      %v309 = vpop.permute.xlu0 %308
      %v311 = vadd.f32 %v301, %v309
      %v312 = vadd.f32 %v302, %v309
      %v313 = vadd.f32 %v303, %v309
      %v314 = vadd.f32 %v304, %v309
      %v315 = vld [vmem:[%s275] sm:$0xff]
      %v316 = vld [vmem:[%s275 + $0x8] sm:$0xff]
      %v317 = vld [vmem:[%s275 + $0x10] sm:$0xff]
      %v318 = vld [vmem:[%s275 + $0x18] sm:$0xff]
      %v319 = vadd.f32 %v311, %v315
      %v320 = vadd.f32 %v312, %v316
      %v321 = vadd.f32 %v313, %v317
      %v322 = vadd.f32 %v314, %v318
      %v323 = vld [vmem:[%s281] sm:$0xff]
      %v324 = vld [vmem:[%s281 + $0x8] sm:$0xff]
      %v325 = vld [vmem:[%s281 + $0x10] sm:$0xff]
      %v326 = vld [vmem:[%s281 + $0x18] sm:$0xff]
      %v327 = vmax.f32 %v319, 0.0
      %v328 = vmax.f32 %v320, 0.0
      %v329 = vmax.f32 %v321, 0.0
      %v330 = vmax.f32 %v322, 0.0
      %v331 = vadd.f32 %v323, %v327
      %v332 = vadd.f32 %v324, %v328
      %v333 = vadd.f32 %v325, %v329
      %v334 = vadd.f32 %v326, %v330
      %335 = vst [vmem:[%s281] sm:$0xff] %v331
      %336 = vst [vmem:[%s281 + $0x8] sm:$0xff] %v332
      %337 = vst [vmem:[%s281 + $0x10] sm:$0xff] %v333
      %338 = vst [vmem:[%s281 + $0x18] sm:$0xff] %v334
      %s339 = smul.u32 4, %s19
      %p340 = scmp.lt.s32.totalorder %s339, 3
      %s341 = scalar_select %p340, %s339, 3
      %s342 = smul.addr %s341, 8
      %s343 = scalar_lea.vmem %s4, %s342
      // Predicated region
      $region41: #{patch_moe_basic_block.7} parent=35 // pred_check
        %p344 = pneg %p151
      $region42: #{patch_moe_basic_block.7} parent=35 // pred_check_branch
        %346 = sbr.rel (%p344) target = $region44
      $region43: #{patch_moe_basic_block.7} parent=35 // pred_region
        %s347 = smul.u32 4, %s19
      $region44: #{patch_moe_basic_block.7} parent=35 // pred_fallthru
        _
      // Predicated region
      $region45: #{patch_moe_basic_block.7} parent=35 // pred_check
        %p348 = pneg %p151
      $region46: #{patch_moe_basic_block.7} parent=35 // pred_check_branch
        %350 = sbr.rel (%p348) target = $region48
      $region47: #{patch_moe_basic_block.7} parent=35 // pred_region
        %s351 = smul.u32 4, %s19
        %p352 = scmp.lt.s32.totalorder %s351, 3
        %s353 = scalar_select %p352, %s351, 3
        %s354 = smul.addr %s353, 8
        %s355 = scalar_lea.vmem %s4, %s354
      $region48: #{patch_moe_basic_block.7} parent=35 // pred_fallthru
        _
    $region36: #{patch_moe_basic_block.7} parent=5 // pred_fallthru
      _
    %p356 = scmp.le.s32.totalorder 2, %s10
    // Predicated region
    $region49: #{patch_moe_basic_block.7} parent=5 // pred_check
      %p357 = pneg %p356
    $region50: #{patch_moe_basic_block.7} parent=5 // pred_check_branch
      %359 = sbr.rel (%p357) target = $region52
    $region51: #{patch_moe_basic_block.7} parent=5 // pred_region
      %s360 = ssub.s32 %s10, 2
    $region52: #{patch_moe_basic_block.7} parent=5 // pred_fallthru
      _
  $region6: #{patch_moe_basic_block.7} parent=0 // loop_footer
    %s14 = sadd.s32 1, %s10
  $region7: #{patch_moe_basic_block.7} parent=0 // loop_footer_branch
    %9 = sbr.rel target = $region3
  $region8: #{patch_moe_basic_block.7} parent=0 // loop_exit
    _

// kernel: patch_moe_basic_block.6
$region0: #{patch_moe_basic_block.6}
  #allocation0 [shape = 'u32[]', space=smem, size = 0x4, offset = 0x4, fixed_abs, tag = 'smem constant byte address 0x4 - core index']
  #allocation1 [shape = 'u32[72,128]{1,0:T(1,128)}', space=vmem, size = 0x9000, scoped, tag = 'internal scratch']
  %s0 = inlined_call_operand.vmem [shape: f32[2,9,8,512], index: 0, kind: input, shape index: {}]
  %s1 = inlined_call_operand.vmem [shape: f32[1,9,512], index: 1, kind: input, shape index: {}]
  %s2 = inlined_call_operand.vmem [shape: f32[2,8,1], index: 2, kind: input, shape index: {}]
  %s3 = inlined_call_operand.vmem [shape: f32[2,8,1], index: 3, kind: input, shape index: {}]
  %s4 = inlined_call_operand.vmem [shape: f32[2,8,72], index: 4, kind: input, shape index: {}]
  %s5 = inlined_call_operand.vmem [shape: f32[2,8,1], index: 5, kind: input, shape index: {}]
  %s6 = inlined_call_operand.vmem [shape: f32[2,8,512], index: 6, kind: output, shape index: {}]
  %s7 = sld [smem:[#allocation0]]
  $region57: #{patch_moe_basic_block.6} parent=0
    _
  %s9 = ssub.s32 1, %s7
  %s10 = scalar_select 0, %s9, %s7
  loop: start=0, step=1, limit=4
  $region2: #{patch_moe_basic_block.6} parent=0 // loop_pre_header
    _
  $region3: #{patch_moe_basic_block.6} parent=0 // loop_header
    %s12 = sphi 0, %s16
    %p13 = scmp.ge.s32.totalorder %s12, 4
    %s19 = sphi 0, %s31
    %s20 = sphi 0, %s27
    %s21 = sphi 0, %s19
    %s22 = sphi 0, %s20
    %s23 = sphi 0, %s21
    %s24 = sphi 0, %s22
    %s36 = sphi 0, %s38
    %s39 = sphi 0, %s36
    %s40 = sphi 0, %s39
    %s56 = sphi 0, %s40
    %s62 = sphi 0, %s64
    %s65 = sphi 0, %s62
    %s66 = sphi 0, %s65
    %s82 = sphi 0, %s66
    %s88 = sphi 0, %s90
    %s91 = sphi 0, %s88
    %s92 = sphi 0, %s91
    %s108 = sphi 0, %s92
    %s114 = sphi 0, %s116
    %s117 = sphi 0, %s114
    %s118 = sphi 0, %s117
    %s134 = sphi 0, %s118
    %s140 = sphi 0, %s142
    %s143 = sphi 0, %s140
    %s144 = sphi 0, %s143
    %s160 = sphi 0, %s144
    %s166 = sphi 0, %s168
    %s169 = sphi 0, %s166
    %s170 = sphi 0, %s169
    %s186 = sphi 0, %s170
    %s194 = sphi 0, %s196
    %s197 = sphi 0, %s194
    %s198 = sphi 0, %s197
    %s214 = sphi 0, %s198
  $region4: #{patch_moe_basic_block.6} parent=0 // loop_header_branch
    %15 = sbr.rel (%p13) target = $region8
  $region5: #{patch_moe_basic_block.6} parent=0 // loop_body
    %s17 = ssub.s32 %s12, 1
    %s18 = ssub.s32 %s12, 2
    %s25 = sadd.s32 1, %s20
    %p26 = scmp.ge.s32.totalorder %s25, 1
    %s27 = scalar_select %p26, 0, %s25
    %s28 = sadd.s32 1, %s19
    %s29 = scalar_select %p26, %s28, %s19
    %p30 = scmp.ge.s32.totalorder %s29, 2
    %s31 = scalar_select %p30, 0, %s29
    %s32 = ssub.s32 %s19, %s31
    %s33 = ssub.s32 %s20, %s27
    %s34 = sor.u32 %s32, %s33
    %p35 = scmp.eq.s32.totalorder %s34, 0
    %s37 = sadd.s32 %s36, 1
    %s38 = scalar_select %p35, %s36, %s37
    %p41 = pneg %p35
    %p42 = scmp.eq.s32.totalorder %s12, 1
    %p43 = por %p41, %p42
    %p44 = scmp.ne.s32.totalorder %s36, %s39
    %p45 = scmp.eq.s32.totalorder %s12, 0
    %p46 = por %p44, %p45
    %p47 = scmp.ne.s32.totalorder %s36, %s39
    %p48 = scmp.eq.s32.totalorder %s17, 1
    %p49 = por %p47, %p48
    %p50 = scmp.ne.s32.totalorder %s39, %s40
    %p51 = scmp.eq.s32.totalorder %s17, 0
    %p52 = por %p50, %p51
    %p53 = scmp.ne.s32.totalorder %s39, %s40
    %p54 = scmp.eq.s32.totalorder %s18, 1
    %p55 = por %p53, %p54
    %p57 = scmp.ne.s32.totalorder %s40, %s56
    %p58 = scmp.eq.s32.totalorder %s18, 0
    %p59 = por %p57, %p58
    %s60 = ssub.s32 %s20, %s27
    %p61 = scmp.eq.s32.totalorder %s60, 0
    %s63 = sadd.s32 %s62, 1
    %s64 = scalar_select %p61, %s62, %s63
    %p67 = pneg %p61
    %p68 = scmp.eq.s32.totalorder %s12, 1
    %p69 = por %p67, %p68
    %p70 = scmp.ne.s32.totalorder %s62, %s65
    %p71 = scmp.eq.s32.totalorder %s12, 0
    %p72 = por %p70, %p71
    %p73 = scmp.ne.s32.totalorder %s62, %s65
    %p74 = scmp.eq.s32.totalorder %s17, 1
    %p75 = por %p73, %p74
    %p76 = scmp.ne.s32.totalorder %s65, %s66
    %p77 = scmp.eq.s32.totalorder %s17, 0
    %p78 = por %p76, %p77
    %p79 = scmp.ne.s32.totalorder %s65, %s66
    %p80 = scmp.eq.s32.totalorder %s18, 1
    %p81 = por %p79, %p80
    %p83 = scmp.ne.s32.totalorder %s66, %s82
    %p84 = scmp.eq.s32.totalorder %s18, 0
    %p85 = por %p83, %p84
    %s86 = ssub.s32 %s19, %s31
    %p87 = scmp.eq.s32.totalorder %s86, 0
    %s89 = sadd.s32 %s88, 1
    %s90 = scalar_select %p87, %s88, %s89
    %p93 = pneg %p87
    %p94 = scmp.eq.s32.totalorder %s12, 1
    %p95 = por %p93, %p94
    %p96 = scmp.ne.s32.totalorder %s88, %s91
    %p97 = scmp.eq.s32.totalorder %s12, 0
    %p98 = por %p96, %p97
    %p99 = scmp.ne.s32.totalorder %s88, %s91
    %p100 = scmp.eq.s32.totalorder %s17, 1
    %p101 = por %p99, %p100
    %p102 = scmp.ne.s32.totalorder %s91, %s92
    %p103 = scmp.eq.s32.totalorder %s17, 0
    %p104 = por %p102, %p103
    %p105 = scmp.ne.s32.totalorder %s91, %s92
    %p106 = scmp.eq.s32.totalorder %s18, 1
    %p107 = por %p105, %p106
    %p109 = scmp.ne.s32.totalorder %s92, %s108
    %p110 = scmp.eq.s32.totalorder %s18, 0
    %p111 = por %p109, %p110
    %s112 = ssub.s32 %s19, %s31
    %p113 = scmp.eq.s32.totalorder %s112, 0
    %s115 = sadd.s32 %s114, 1
    %s116 = scalar_select %p113, %s114, %s115
    %p119 = pneg %p113
    %p120 = scmp.eq.s32.totalorder %s12, 1
    %p121 = por %p119, %p120
    %p122 = scmp.ne.s32.totalorder %s114, %s117
    %p123 = scmp.eq.s32.totalorder %s12, 0
    %p124 = por %p122, %p123
    %p125 = scmp.ne.s32.totalorder %s114, %s117
    %p126 = scmp.eq.s32.totalorder %s17, 1
    %p127 = por %p125, %p126
    %p128 = scmp.ne.s32.totalorder %s117, %s118
    %p129 = scmp.eq.s32.totalorder %s17, 0
    %p130 = por %p128, %p129
    %p131 = scmp.ne.s32.totalorder %s117, %s118
    %p132 = scmp.eq.s32.totalorder %s18, 1
    %p133 = por %p131, %p132
    %p135 = scmp.ne.s32.totalorder %s118, %s134
    %p136 = scmp.eq.s32.totalorder %s18, 0
    %p137 = por %p135, %p136
    %s138 = ssub.s32 %s19, %s31
    %p139 = scmp.eq.s32.totalorder %s138, 0
    %s141 = sadd.s32 %s140, 1
    %s142 = scalar_select %p139, %s140, %s141
    %p145 = pneg %p139
    %p146 = scmp.eq.s32.totalorder %s12, 1
    %p147 = por %p145, %p146
    %p148 = scmp.ne.s32.totalorder %s140, %s143
    %p149 = scmp.eq.s32.totalorder %s12, 0
    %p150 = por %p148, %p149
    %p151 = scmp.ne.s32.totalorder %s140, %s143
    %p152 = scmp.eq.s32.totalorder %s17, 1
    %p153 = por %p151, %p152
    %p154 = scmp.ne.s32.totalorder %s143, %s144
    %p155 = scmp.eq.s32.totalorder %s17, 0
    %p156 = por %p154, %p155
    %p157 = scmp.ne.s32.totalorder %s143, %s144
    %p158 = scmp.eq.s32.totalorder %s18, 1
    %p159 = por %p157, %p158
    %p161 = scmp.ne.s32.totalorder %s144, %s160
    %p162 = scmp.eq.s32.totalorder %s18, 0
    %p163 = por %p161, %p162
    %s164 = ssub.s32 %s19, %s31
    %p165 = scmp.eq.s32.totalorder %s164, 0
    %s167 = sadd.s32 %s166, 1
    %s168 = scalar_select %p165, %s166, %s167
    %p171 = pneg %p165
    %p172 = scmp.eq.s32.totalorder %s12, 1
    %p173 = por %p171, %p172
    %p174 = scmp.ne.s32.totalorder %s166, %s169
    %p175 = scmp.eq.s32.totalorder %s12, 0
    %p176 = por %p174, %p175
    %p177 = scmp.ne.s32.totalorder %s166, %s169
    %p178 = scmp.eq.s32.totalorder %s17, 1
    %p179 = por %p177, %p178
    %p180 = scmp.ne.s32.totalorder %s169, %s170
    %p181 = scmp.eq.s32.totalorder %s17, 0
    %p182 = por %p180, %p181
    %p183 = scmp.ne.s32.totalorder %s169, %s170
    %p184 = scmp.eq.s32.totalorder %s18, 1
    %p185 = por %p183, %p184
    %p187 = scmp.ne.s32.totalorder %s170, %s186
    %p188 = scmp.eq.s32.totalorder %s18, 0
    %p189 = por %p187, %p188
    %s190 = ssub.s32 %s19, %s31
    %s191 = ssub.s32 %s20, %s27
    %s192 = sor.u32 %s190, %s191
    %p193 = scmp.eq.s32.totalorder %s192, 0
    %s195 = sadd.s32 %s194, 1
    %s196 = scalar_select %p193, %s194, %s195
    %p199 = pneg %p193
    %p200 = scmp.eq.s32.totalorder %s12, 1
    %p201 = por %p199, %p200
    %p202 = scmp.ne.s32.totalorder %s194, %s197
    %p203 = scmp.eq.s32.totalorder %s12, 0
    %p204 = por %p202, %p203
    %p205 = scmp.ne.s32.totalorder %s194, %s197
    %p206 = scmp.eq.s32.totalorder %s17, 1
    %p207 = por %p205, %p206
    %p208 = scmp.ne.s32.totalorder %s197, %s198
    %p209 = scmp.eq.s32.totalorder %s17, 0
    %p210 = por %p208, %p209
    %p211 = scmp.ne.s32.totalorder %s197, %s198
    %p212 = scmp.eq.s32.totalorder %s18, 1
    %p213 = por %p211, %p212
    %p215 = scmp.ne.s32.totalorder %s198, %s214
    %p216 = scmp.eq.s32.totalorder %s18, 0
    %p217 = por %p215, %p216
    %p218 = scmp.le.s32.totalorder 1, %s12
    %p219 = scmp.lt.s32.totalorder %s12, 3
    %p220 = pnand %p218, %p219
    %p221 = pneg %p220
    // Predicated region
    $region9: #{patch_moe_basic_block.6} parent=5 // pred_check
      _
    $region10: #{patch_moe_basic_block.6} parent=5 // pred_check_branch
      %223 = sbr.rel (%p220) target = $region12
    $region11: #{patch_moe_basic_block.6} parent=5 // pred_region
      %s224 = ssub.s32 %s12, 1
      // Predicated region
      $region13: #{patch_moe_basic_block.6} parent=11 // pred_check
        %p225 = pneg %p78
      $region14: #{patch_moe_basic_block.6} parent=11 // pred_check_branch
        %227 = sbr.rel (%p225) target = $region16
      $region15: #{patch_moe_basic_block.6} parent=11 // pred_region
        %s228 = smul.u32 4, %s22
        %p229 = scmp.lt.s32.totalorder %s228, 3
        %s230 = scalar_select %p229, %s228, 3
        %s231 = smul.addr %s230, 8
        %s232 = scalar_lea.vmem %s1, %s231
        %s233 = smul.u32 4, %s22
      $region16: #{patch_moe_basic_block.6} parent=11 // pred_fallthru
        _
    $region12: #{patch_moe_basic_block.6} parent=5 // pred_fallthru
      _
    %p234 = scmp.lt.s32.totalorder %s12, 2
    // Predicated region
    $region17: #{patch_moe_basic_block.6} parent=5 // pred_check
      %p235 = pneg %p234
    $region18: #{patch_moe_basic_block.6} parent=5 // pred_check_branch
      %237 = sbr.rel (%p235) target = $region20
    $region19: #{patch_moe_basic_block.6} parent=5 // pred_region
      // Predicated region
      $region21: #{patch_moe_basic_block.6} parent=19 // pred_check
        %p238 = pneg %p46
      $region22: #{patch_moe_basic_block.6} parent=19 // pred_check_branch
        %240 = sbr.rel (%p238) target = $region24
      $region23: #{patch_moe_basic_block.6} parent=19 // pred_region
        %s241 = smul.u32 4, %s20
        %p242 = scmp.lt.s32.totalorder %s19, 1
        %s243 = scalar_select %p242, %s19, 1
        %p244 = scmp.lt.s32.totalorder %s241, 3
        %s245 = scalar_select %p244, %s241, 3
        %s246 = smul.addr %s243, 36
        %s247 = sadd.s32 %s245, %s246
        %s248 = smul.addr %s247, 8
        %s249 = scalar_lea.vmem %s0, %s248
        %s250 = smul.u32 4, %s20
      $region24: #{patch_moe_basic_block.6} parent=19 // pred_fallthru
        _
      // Predicated region
      $region25: #{patch_moe_basic_block.6} parent=19 // pred_check
        %p251 = pneg %p98
      $region26: #{patch_moe_basic_block.6} parent=19 // pred_check_branch
        %253 = sbr.rel (%p251) target = $region28
      $region27: #{patch_moe_basic_block.6} parent=19 // pred_region
        %p254 = scmp.lt.s32.totalorder %s19, 1
        %s255 = scalar_select %p254, %s19, 1
        %s256 = smul.addr %s255, 8
        %s257 = scalar_lea.vmem %s2, %s256
      $region28: #{patch_moe_basic_block.6} parent=19 // pred_fallthru
        _
      // Predicated region
      $region29: #{patch_moe_basic_block.6} parent=19 // pred_check
        %p258 = pneg %p124
      $region30: #{patch_moe_basic_block.6} parent=19 // pred_check_branch
        %260 = sbr.rel (%p258) target = $region32
      $region31: #{patch_moe_basic_block.6} parent=19 // pred_region
        %p261 = scmp.lt.s32.totalorder %s19, 1
        %s262 = scalar_select %p261, %s19, 1
        %s263 = smul.addr %s262, 8
        %s264 = scalar_lea.vmem %s3, %s263
      $region32: #{patch_moe_basic_block.6} parent=19 // pred_fallthru
        _
      // Predicated region
      $region33: #{patch_moe_basic_block.6} parent=19 // pred_check
        %p265 = pneg %p150
      $region34: #{patch_moe_basic_block.6} parent=19 // pred_check_branch
        %267 = sbr.rel (%p265) target = $region36
      $region35: #{patch_moe_basic_block.6} parent=19 // pred_region
        %p268 = scmp.lt.s32.totalorder %s19, 1
        %s269 = scalar_select %p268, %s19, 1
        %s270 = smul.addr %s269, 8
        %s271 = scalar_lea.vmem %s4, %s270
      $region36: #{patch_moe_basic_block.6} parent=19 // pred_fallthru
        _
      // Predicated region
      $region37: #{patch_moe_basic_block.6} parent=19 // pred_check
        %p272 = pneg %p176
      $region38: #{patch_moe_basic_block.6} parent=19 // pred_check_branch
        %274 = sbr.rel (%p272) target = $region40
      $region39: #{patch_moe_basic_block.6} parent=19 // pred_region
        %p275 = scmp.lt.s32.totalorder %s19, 1
        %s276 = scalar_select %p275, %s19, 1
        %s277 = smul.addr %s276, 8
        %s278 = scalar_lea.vmem %s5, %s277
      $region40: #{patch_moe_basic_block.6} parent=19 // pred_fallthru
        _
    $region20: #{patch_moe_basic_block.6} parent=5 // pred_fallthru
      _
    %p279 = scmp.le.s32.totalorder 1, %s12
    %p280 = scmp.lt.s32.totalorder %s12, 3
    %p281 = pnand %p279, %p280
    %p282 = pneg %p281
    // Predicated region
    $region41: #{patch_moe_basic_block.6} parent=5 // pred_check
      _
    $region42: #{patch_moe_basic_block.6} parent=5 // pred_check_branch
      %284 = sbr.rel (%p281) target = $region44
    $region43: #{patch_moe_basic_block.6} parent=5 // pred_region
      %s285 = ssub.s32 %s12, 1
      %s286 = smul.u32 4, %s22
      %p287 = scmp.lt.s32.totalorder %s21, 1
      %s288 = scalar_select %p287, %s21, 1
      %p289 = scmp.lt.s32.totalorder %s286, 3
      %s290 = scalar_select %p289, %s286, 3
      %s291 = smul.addr %s288, 36
      %s292 = sadd.s32 %s290, %s291
      %s293 = smul.addr %s292, 8
      %s294 = scalar_lea.vmem %s0, %s293
      %p295 = pneg %p52
      %p296 = pneg %p49
      %s297 = smul.u32 4, %s22
      %p298 = scmp.lt.s32.totalorder %s297, 3
      %s299 = scalar_select %p298, %s297, 3
      %s300 = smul.addr %s299, 8
      %s301 = scalar_lea.vmem %s1, %s300
      %p302 = pneg %p78
      %p303 = pneg %p75
      %p304 = scmp.lt.s32.totalorder %s21, 1
      %s305 = scalar_select %p304, %s21, 1
      %s306 = smul.addr %s305, 8
      %s307 = scalar_lea.vmem %s2, %s306
      %p308 = pneg %p104
      %p309 = pneg %p101
      %p310 = scmp.lt.s32.totalorder %s21, 1
      %s311 = scalar_select %p310, %s21, 1
      %s312 = smul.addr %s311, 8
      %s313 = scalar_lea.vmem %s3, %s312
      %p314 = pneg %p130
      %p315 = pneg %p127
      %p316 = scmp.lt.s32.totalorder %s21, 1
      %s317 = scalar_select %p316, %s21, 1
      %s318 = smul.addr %s317, 8
      %s319 = scalar_lea.vmem %s4, %s318
      %p320 = pneg %p156
      %p321 = pneg %p153
      %p322 = scmp.lt.s32.totalorder %s21, 1
      %s323 = scalar_select %p322, %s21, 1
      %s324 = smul.addr %s323, 8
      %s325 = scalar_lea.vmem %s5, %s324
      %p326 = pneg %p182
      %p327 = pneg %p179
      %p328 = pneg %p210
      %p329 = pneg %p207
      %s330 = smul.u32 4, %s22
      %p331 = scmp.lt.s32.totalorder %s21, 1
      %s332 = scalar_select %p331, %s21, 1
      %p333 = scmp.lt.s32.totalorder %s330, 3
      %s334 = scalar_select %p333, %s330, 3
      %s335 = smul.addr %s332, 4
      %s336 = sadd.s32 %s334, %s335
      %s337 = smul.addr %s336, 8
      %s338 = scalar_lea.vmem %s6, %s337
      %s339 = smul.u32 4, %s22
      %p340 = scmp.lt.s32.totalorder %s21, 1
      %s341 = scalar_select %p340, %s21, 1
      %p342 = scmp.lt.s32.totalorder %s339, 3
      %s343 = scalar_select %p342, %s339, 3
      %s344 = smul.addr %s341, 36
      %s345 = sadd.s32 %s343, %s344
      %s346 = smul.addr %s345, 8
      %s347 = scalar_lea.vmem %s0, %s346
      %s348 = smul.u32 4, %s22
      %s349 = smul.u32 4, %s22
      %p350 = scmp.lt.s32.totalorder %s349, 3
      %s351 = scalar_select %p350, %s349, 3
      %s352 = smul.addr %s351, 8
      %s353 = scalar_lea.vmem %s1, %s352
      %s354 = smul.u32 4, %s22
      %p355 = scmp.lt.s32.totalorder %s21, 1
      %s356 = scalar_select %p355, %s21, 1
      %s357 = smul.addr %s356, 8
      %s358 = scalar_lea.vmem %s2, %s357
      %p359 = scmp.lt.s32.totalorder %s21, 1
      %s360 = scalar_select %p359, %s21, 1
      %s361 = smul.addr %s360, 8
      %s362 = scalar_lea.vmem %s3, %s361
      %p363 = scmp.lt.s32.totalorder %s21, 1
      %s364 = scalar_select %p363, %s21, 1
      %s365 = smul.addr %s364, 8
      %s366 = scalar_lea.vmem %s4, %s365
      %p367 = scmp.lt.s32.totalorder %s21, 1
      %s368 = scalar_select %p367, %s21, 1
      %s369 = smul.addr %s368, 8
      %s370 = scalar_lea.vmem %s5, %s369
      %s371 = smul.u32 4, %s22
      %p372 = scmp.lt.s32.totalorder %s21, 1
      %s373 = scalar_select %p372, %s21, 1
      %p374 = scmp.lt.s32.totalorder %s371, 3
      %s375 = scalar_select %p374, %s371, 3
      %s376 = smul.addr %s373, 4
      %s377 = sadd.s32 %s375, %s376
      %s378 = smul.addr %s377, 8
      %s379 = scalar_lea.vmem %s6, %s378
      %s380 = smul.u32 4, %s22
      %v381 = vld [vmem:[%s347] sm:$0xff]
      %v382 = vld [vmem:[%s347 + $0x8] sm:$0xff]
      %v383 = vld [vmem:[%s347 + $0x10] sm:$0xff]
      %v384 = vld [vmem:[%s347 + $0x18] sm:$0xff]
      %v385 = vld [vmem:[%s347 + $0x20] sm:$0xff]
      %v386 = vld [vmem:[%s347 + $0x28] sm:$0xff]
      %v387 = vld [vmem:[%s347 + $0x30] sm:$0xff]
      %v388 = vld [vmem:[%s347 + $0x38] sm:$0xff]
      %v389 = vld [vmem:[%s347 + $0x40] sm:$0xff]
      %v390 = vld [vmem:[%s347 + $0x48] sm:$0xff]
      %v391 = vld [vmem:[%s347 + $0x50] sm:$0xff]
      %v392 = vld [vmem:[%s347 + $0x58] sm:$0xff]
      %v393 = vld [vmem:[%s347 + $0x60] sm:$0xff]
      %v394 = vld [vmem:[%s347 + $0x68] sm:$0xff]
      %v395 = vld [vmem:[%s347 + $0x70] sm:$0xff]
      %v396 = vld [vmem:[%s347 + $0x78] sm:$0xff]
      %v397 = vld [vmem:[%s347 + $0x80] sm:$0xff]
      %v398 = vld [vmem:[%s347 + $0x88] sm:$0xff]
      %v399 = vld [vmem:[%s347 + $0x90] sm:$0xff]
      %v400 = vld [vmem:[%s347 + $0x98] sm:$0xff]
      %v401 = vld [vmem:[%s347 + $0xa0] sm:$0xff]
      %v402 = vld [vmem:[%s347 + $0xa8] sm:$0xff]
      %v403 = vld [vmem:[%s347 + $0xb0] sm:$0xff]
      %v404 = vld [vmem:[%s347 + $0xb8] sm:$0xff]
      %v405 = vld [vmem:[%s347 + $0xc0] sm:$0xff]
      %v406 = vld [vmem:[%s347 + $0xc8] sm:$0xff]
      %v407 = vld [vmem:[%s347 + $0xd0] sm:$0xff]
      %v408 = vld [vmem:[%s347 + $0xd8] sm:$0xff]
      %v409 = vld [vmem:[%s347 + $0xe0] sm:$0xff]
      %v410 = vld [vmem:[%s347 + $0xe8] sm:$0xff]
      %v411 = vld [vmem:[%s347 + $0xf0] sm:$0xff]
      %v412 = vld [vmem:[%s347 + $0xf8] sm:$0xff]
      %v413 = vld [vmem:[%s347 + $0x100] sm:$0xff]
      %v414 = vld [vmem:[%s347 + $0x108] sm:$0xff]
      %v415 = vld [vmem:[%s347 + $0x110] sm:$0xff]
      %v416 = vld [vmem:[%s347 + $0x118] sm:$0xff]
      %v417 = vld [vmem:[%s358] sm:$0xff]
      %419 = vset.pattern.permute.xlu0 0
      %420 = vperm.xlu0 %419, %v417
      %v421 = vpop.permute.xlu0 %420
      %v423 = vmul.f32 %v381, %v421
      %v424 = vmul.f32 %v382, %v421
      %v425 = vmul.f32 %v383, %v421
      %v426 = vmul.f32 %v384, %v421
      %v427 = vmul.f32 %v385, %v421
      %v428 = vmul.f32 %v386, %v421
      %v429 = vmul.f32 %v387, %v421
      %v430 = vmul.f32 %v388, %v421
      %v431 = vmul.f32 %v389, %v421
      %v432 = vmul.f32 %v390, %v421
      %v433 = vmul.f32 %v391, %v421
      %v434 = vmul.f32 %v392, %v421
      %v435 = vmul.f32 %v393, %v421
      %v436 = vmul.f32 %v394, %v421
      %v437 = vmul.f32 %v395, %v421
      %v438 = vmul.f32 %v396, %v421
      %v439 = vmul.f32 %v397, %v421
      %v440 = vmul.f32 %v398, %v421
      %v441 = vmul.f32 %v399, %v421
      %v442 = vmul.f32 %v400, %v421
      %v443 = vmul.f32 %v401, %v421
      %v444 = vmul.f32 %v402, %v421
      %v445 = vmul.f32 %v403, %v421
      %v446 = vmul.f32 %v404, %v421
      %v447 = vmul.f32 %v405, %v421
      %v448 = vmul.f32 %v406, %v421
      %v449 = vmul.f32 %v407, %v421
      %v450 = vmul.f32 %v408, %v421
      %v451 = vmul.f32 %v409, %v421
      %v452 = vmul.f32 %v410, %v421
      %v453 = vmul.f32 %v411, %v421
      %v454 = vmul.f32 %v412, %v421
      %v455 = vmul.f32 %v413, %v421
      %v456 = vmul.f32 %v414, %v421
      %v457 = vmul.f32 %v415, %v421
      %v458 = vmul.f32 %v416, %v421
      %v459 = vld [vmem:[%s362] sm:$0xff]
      %461 = vset.pattern.permute.xlu0 0
      %462 = vperm.xlu0 %461, %v459
      %v463 = vpop.permute.xlu0 %462
      %v465 = vadd.f32 %v423, %v463
      %v466 = vadd.f32 %v424, %v463
      %v467 = vadd.f32 %v425, %v463
      %v468 = vadd.f32 %v426, %v463
      %v469 = vadd.f32 %v427, %v463
      %v470 = vadd.f32 %v428, %v463
      %v471 = vadd.f32 %v429, %v463
      %v472 = vadd.f32 %v430, %v463
      %v473 = vadd.f32 %v431, %v463
      %v474 = vadd.f32 %v432, %v463
      %v475 = vadd.f32 %v433, %v463
      %v476 = vadd.f32 %v434, %v463
      %v477 = vadd.f32 %v435, %v463
      %v478 = vadd.f32 %v436, %v463
      %v479 = vadd.f32 %v437, %v463
      %v480 = vadd.f32 %v438, %v463
      %v481 = vadd.f32 %v439, %v463
      %v482 = vadd.f32 %v440, %v463
      %v483 = vadd.f32 %v441, %v463
      %v484 = vadd.f32 %v442, %v463
      %v485 = vadd.f32 %v443, %v463
      %v486 = vadd.f32 %v444, %v463
      %v487 = vadd.f32 %v445, %v463
      %v488 = vadd.f32 %v446, %v463
      %v489 = vadd.f32 %v447, %v463
      %v490 = vadd.f32 %v448, %v463
      %v491 = vadd.f32 %v449, %v463
      %v492 = vadd.f32 %v450, %v463
      %v493 = vadd.f32 %v451, %v463
      %v494 = vadd.f32 %v452, %v463
      %v495 = vadd.f32 %v453, %v463
      %v496 = vadd.f32 %v454, %v463
      %v497 = vadd.f32 %v455, %v463
      %v498 = vadd.f32 %v456, %v463
      %v499 = vadd.f32 %v457, %v463
      %v500 = vadd.f32 %v458, %v463
      %v501 = vmax.f32 %v465, 0.0
      %v502 = vmax.f32 %v466, 0.0
      %v503 = vmax.f32 %v467, 0.0
      %v504 = vmax.f32 %v468, 0.0
      %v505 = vmax.f32 %v469, 0.0
      %v506 = vmax.f32 %v470, 0.0
      %v507 = vmax.f32 %v471, 0.0
      %v508 = vmax.f32 %v472, 0.0
      %v509 = vmax.f32 %v473, 0.0
      %v510 = vmax.f32 %v474, 0.0
      %v511 = vmax.f32 %v475, 0.0
      %v512 = vmax.f32 %v476, 0.0
      %v513 = vmax.f32 %v477, 0.0
      %v514 = vmax.f32 %v478, 0.0
      %v515 = vmax.f32 %v479, 0.0
      %v516 = vmax.f32 %v480, 0.0
      %v517 = vmax.f32 %v481, 0.0
      %v518 = vmax.f32 %v482, 0.0
      %v519 = vmax.f32 %v483, 0.0
      %v520 = vmax.f32 %v484, 0.0
      %v521 = vmax.f32 %v485, 0.0
      %v522 = vmax.f32 %v486, 0.0
      %v523 = vmax.f32 %v487, 0.0
      %v524 = vmax.f32 %v488, 0.0
      %v525 = vmax.f32 %v489, 0.0
      %v526 = vmax.f32 %v490, 0.0
      %v527 = vmax.f32 %v491, 0.0
      %v528 = vmax.f32 %v492, 0.0
      %v529 = vmax.f32 %v493, 0.0
      %v530 = vmax.f32 %v494, 0.0
      %v531 = vmax.f32 %v495, 0.0
      %v532 = vmax.f32 %v496, 0.0
      %v533 = vmax.f32 %v497, 0.0
      %v534 = vmax.f32 %v498, 0.0
      %v535 = vmax.f32 %v499, 0.0
      %v536 = vmax.f32 %v500, 0.0
      %v537 = vld [vmem:[%s353] sm:$0xff]
      %v538 = vld [vmem:[%s353 + $0x8] sm:$0xff]
      %v539 = vld [vmem:[%s353 + $0x10] sm:$0xff]
      %v540 = vld [vmem:[%s353 + $0x18] sm:$0xff]
      %v541 = vld [vmem:[%s353 + $0x20] sm:$0x1]
      %v542 = vld [vmem:[%s353 + $0x28] sm:$0x1]
      %v543 = vld [vmem:[%s353 + $0x30] sm:$0x1]
      %v544 = vld [vmem:[%s353 + $0x38] sm:$0x1]
      %v553 = vrot.slane %v538, 7
      %v554 = vrot.slane %v539, 6
      %v555 = vrot.slane %v540, 5
      %v556 = vrot.slane %v542, 7
      %v557 = vrot.slane %v543, 6
      %v558 = vrot.slane %v544, 5
      %vm559 = vcmask 1040384
      %v560 = vsel %vm559, %v537, %v553
      %vm561 = vcmask 1042434
      %v562 = vsel %vm561, %v554, %v555
      %vm563 = vcmask 1041408
      %v564 = vsel %vm563, %v560, %v562
      %vm565 = vcmask 1041409
      %v566 = vsel %vm565, %v537, %v553
      %vm567 = vcmask 1043459
      %v568 = vsel %vm567, %v554, %v555
      %vm569 = vcmask 1042433
      %v570 = vsel %vm569, %v566, %v568
      %v571 = vrot.slane %v570, 1
      %v572 = vsel %vm561, %v537, %v553
      %vm573 = vcmask 1044484
      %v574 = vsel %vm573, %v554, %v555
      %vm575 = vcmask 1043458
      %v576 = vsel %vm575, %v572, %v574
      %v577 = vrot.slane %v576, 2
      %v578 = vsel %vm567, %v537, %v553
      %vm579 = vcmask 1045509
      %v580 = vsel %vm579, %v554, %v555
      %vm581 = vcmask 1044483
      %v582 = vsel %vm581, %v578, %v580
      %v583 = vrot.slane %v582, 3
      %v584 = vsel %vm573, %v537, %v553
      %vm585 = vcmask 1046534
      %v586 = vsel %vm585, %v554, %v555
      %vm587 = vcmask 1045508
      %v588 = vsel %vm587, %v584, %v586
      %v589 = vrot.slane %v588, 4
      %v590 = vsel %vm579, %v537, %v553
      %vm591 = vcmask 1046528
      %v592 = vsel %vm591, %v555, %v554
      %vm593 = vcmask 1046533
      %v594 = vsel %vm593, %v590, %v592
      %v595 = vrot.slane %v594, 5
      %v596 = vsel %vm585, %v537, %v553
      %v597 = vsel %vm559, %v554, %v555
      %vm598 = vcmask 1045504
      %v599 = vsel %vm598, %v597, %v596
      %v600 = vrot.slane %v599, 6
      %v601 = vsel %vm591, %v553, %v537
      %v602 = vsel %vm565, %v554, %v555
      %vm603 = vcmask 1046529
      %v604 = vsel %vm603, %v602, %v601
      %v605 = vrot.slane %v604, 7
      %v606 = vsel %vm559, %v541, %v556
      %v607 = vsel %vm561, %v557, %v558
      %v608 = vsel %vm563, %v606, %v607
      %v609 = vperm.slane %v564, 0
      %v610 = vperm.slane %v564, 1
      %v611 = vperm.slane %v564, 2
      %v612 = vperm.slane %v564, 3
      %v613 = vperm.slane %v571, 0
      %v614 = vperm.slane %v571, 1
      %v615 = vperm.slane %v571, 2
      %v616 = vperm.slane %v571, 3
      %v617 = vperm.slane %v577, 0
      %v618 = vperm.slane %v577, 1
      %v619 = vperm.slane %v577, 2
      %v620 = vperm.slane %v577, 3
      %v621 = vperm.slane %v583, 0
      %v622 = vperm.slane %v583, 1
      %v623 = vperm.slane %v583, 2
      %v624 = vperm.slane %v583, 3
      %v625 = vperm.slane %v589, 0
      %v626 = vperm.slane %v589, 1
      %v627 = vperm.slane %v589, 2
      %v628 = vperm.slane %v589, 3
      %v629 = vperm.slane %v595, 0
      %v630 = vperm.slane %v595, 1
      %v631 = vperm.slane %v595, 2
      %v632 = vperm.slane %v595, 3
      %v633 = vperm.slane %v600, 0
      %v634 = vperm.slane %v600, 1
      %v635 = vperm.slane %v600, 2
      %v636 = vperm.slane %v600, 3
      %v637 = vperm.slane %v605, 0
      %v638 = vperm.slane %v605, 1
      %v639 = vperm.slane %v605, 2
      %v640 = vperm.slane %v605, 3
      %v641 = vperm.slane %v608, 0
      %v642 = vperm.slane %v608, 1
      %v643 = vperm.slane %v608, 2
      %v644 = vperm.slane %v608, 3
      %v681 = vmul.f32 %v501, %v609
      %v682 = vmul.f32 %v502, %v610
      %v683 = vmul.f32 %v503, %v611
      %v684 = vmul.f32 %v504, %v612
      %v685 = vmul.f32 %v505, %v613
      %v686 = vmul.f32 %v506, %v614
      %v687 = vmul.f32 %v507, %v615
      %v688 = vmul.f32 %v508, %v616
      %v689 = vmul.f32 %v509, %v617
      %v690 = vmul.f32 %v510, %v618
      %v691 = vmul.f32 %v511, %v619
      %v692 = vmul.f32 %v512, %v620
      %v693 = vmul.f32 %v513, %v621
      %v694 = vmul.f32 %v514, %v622
      %v695 = vmul.f32 %v515, %v623
      %v696 = vmul.f32 %v516, %v624
      %v697 = vmul.f32 %v517, %v625
      %v698 = vmul.f32 %v518, %v626
      %v699 = vmul.f32 %v519, %v627
      %v700 = vmul.f32 %v520, %v628
      %v701 = vmul.f32 %v521, %v629
      %v702 = vmul.f32 %v522, %v630
      %v703 = vmul.f32 %v523, %v631
      %v704 = vmul.f32 %v524, %v632
      %v705 = vmul.f32 %v525, %v633
      %v706 = vmul.f32 %v526, %v634
      %v707 = vmul.f32 %v527, %v635
      %v708 = vmul.f32 %v528, %v636
      %v709 = vmul.f32 %v529, %v637
      %v710 = vmul.f32 %v530, %v638
      %v711 = vmul.f32 %v531, %v639
      %v712 = vmul.f32 %v532, %v640
      %v713 = vmul.f32 %v533, %v641
      %v714 = vmul.f32 %v534, %v642
      %v715 = vmul.f32 %v535, %v643
      %v716 = vmul.f32 %v536, %v644
      %v717 = vld [vmem:[%s366] sm:$0xff]
      %v718 = vld [vmem:[%s370] sm:$0xff]
      %720 = vset.pattern.permute.xlu0 0
      %721 = vperm.xlu0 %720, %v718
      %v722 = vpop.permute.xlu0 %721
      %vm724 = vcmask 588800
      %v726 = vsel %vm724, %v717, 0
      %728 = vmatpush.msra.mxu0 0.0
      %729 = vmatpush.msra.mxu0 0.0
      %730 = vmatpush.msra.mxu0 0.0
      %731 = vmatpush.msra.mxu0 0.0
      %732 = vmatpush.msra.mxu0 0.0
      %733 = vmatpush.msra.mxu0 0.0
      %734 = vmatpush.msra.mxu0 0.0
      %735 = vmatpush.msra.mxu0 %v713
      %736 = vmatpush.msra.mxu0 %v709
      %737 = vmatpush.msra.mxu0 %v705
      %738 = vmatpush.msra.mxu0 %v701
      %739 = vmatpush.msra.mxu0 %v697
      %740 = vmatpush.msra.mxu0 %v693
      %741 = vmatpush.msra.mxu0 %v689
      %742 = vmatpush.msra.mxu0 %v685
      %743 = vmatpush.msra.mxu0 %v681
      %744 = vmatmul.f32.gmra.mxu0 %v726
      %v745 = vpop.f32.mrf.mxu0
      %v746 = vadd.f32 %v722, %v745
      %747 = vdwg.mxu0
      %748 = vmatpush.msra.mxu0 0.0
      %749 = vmatpush.msra.mxu0 0.0
      %750 = vmatpush.msra.mxu0 0.0
      %751 = vmatpush.msra.mxu0 0.0
      %752 = vmatpush.msra.mxu0 0.0
      %753 = vmatpush.msra.mxu0 0.0
      %754 = vmatpush.msra.mxu0 0.0
      %755 = vmatpush.msra.mxu0 %v714
      %756 = vmatpush.msra.mxu0 %v710
      %757 = vmatpush.msra.mxu0 %v706
      %758 = vmatpush.msra.mxu0 %v702
      %759 = vmatpush.msra.mxu0 %v698
      %760 = vmatpush.msra.mxu0 %v694
      %761 = vmatpush.msra.mxu0 %v690
      %762 = vmatpush.msra.mxu0 %v686
      %763 = vmatpush.msra.mxu0 %v682
      %764 = vmatmul.f32.gmra.mxu0 %v726
      %v765 = vpop.f32.mrf.mxu0
      %v766 = vadd.f32 %v722, %v765
      %767 = vdwg.mxu0
      %768 = vmatpush.msra.mxu0 0.0
      %769 = vmatpush.msra.mxu0 0.0
      %770 = vmatpush.msra.mxu0 0.0
      %771 = vmatpush.msra.mxu0 0.0
      %772 = vmatpush.msra.mxu0 0.0
      %773 = vmatpush.msra.mxu0 0.0
      %774 = vmatpush.msra.mxu0 0.0
      %775 = vmatpush.msra.mxu0 %v715
      %776 = vmatpush.msra.mxu0 %v711
      %777 = vmatpush.msra.mxu0 %v707
      %778 = vmatpush.msra.mxu0 %v703
      %779 = vmatpush.msra.mxu0 %v699
      %780 = vmatpush.msra.mxu0 %v695
      %781 = vmatpush.msra.mxu0 %v691
      %782 = vmatpush.msra.mxu0 %v687
      %783 = vmatpush.msra.mxu0 %v683
      %784 = vmatmul.f32.gmra.mxu0 %v726
      %v785 = vpop.f32.mrf.mxu0
      %v786 = vadd.f32 %v722, %v785
      %787 = vdwg.mxu0
      %788 = vmatpush.msra.mxu0 0.0
      %789 = vmatpush.msra.mxu0 0.0
      %790 = vmatpush.msra.mxu0 0.0
      %791 = vmatpush.msra.mxu0 0.0
      %792 = vmatpush.msra.mxu0 0.0
      %793 = vmatpush.msra.mxu0 0.0
      %794 = vmatpush.msra.mxu0 0.0
      %795 = vmatpush.msra.mxu0 %v716
      %796 = vmatpush.msra.mxu0 %v712
      %797 = vmatpush.msra.mxu0 %v708
      %798 = vmatpush.msra.mxu0 %v704
      %799 = vmatpush.msra.mxu0 %v700
      %800 = vmatpush.msra.mxu0 %v696
      %801 = vmatpush.msra.mxu0 %v692
      %802 = vmatpush.msra.mxu0 %v688
      %803 = vmatpush.msra.mxu0 %v684
      %804 = vmatmul.f32.gmra.mxu0 %v726
      %v805 = vpop.f32.mrf.mxu0
      %v806 = vadd.f32 %v722, %v805
      %807 = vdwg.mxu0
      %808 = vst [vmem:[%s379] sm:$0xff] %v746
      %809 = vst [vmem:[%s379 + $0x8] sm:$0xff] %v766
      %810 = vst [vmem:[%s379 + $0x10] sm:$0xff] %v786
      %811 = vst [vmem:[%s379 + $0x18] sm:$0xff] %v806
      %s812 = smul.u32 4, %s22
      %p813 = scmp.lt.s32.totalorder %s21, 1
      %s814 = scalar_select %p813, %s21, 1
      %p815 = scmp.lt.s32.totalorder %s812, 3
      %s816 = scalar_select %p815, %s812, 3
      %s817 = smul.addr %s814, 4
      %s818 = sadd.s32 %s816, %s817
      %s819 = smul.addr %s818, 8
      %s820 = scalar_lea.vmem %s6, %s819
      // Predicated region
      $region45: #{patch_moe_basic_block.6} parent=43 // pred_check
        %p821 = pneg %p207
      $region46: #{patch_moe_basic_block.6} parent=43 // pred_check_branch
        %823 = sbr.rel (%p821) target = $region48
      $region47: #{patch_moe_basic_block.6} parent=43 // pred_region
        %s824 = smul.u32 4, %s22
      $region48: #{patch_moe_basic_block.6} parent=43 // pred_fallthru
        _
    $region44: #{patch_moe_basic_block.6} parent=5 // pred_fallthru
      _
    %p825 = scmp.le.s32.totalorder 2, %s12
    // Predicated region
    $region49: #{patch_moe_basic_block.6} parent=5 // pred_check
      %p826 = pneg %p825
    $region50: #{patch_moe_basic_block.6} parent=5 // pred_check_branch
      %828 = sbr.rel (%p826) target = $region52
    $region51: #{patch_moe_basic_block.6} parent=5 // pred_region
      %s829 = ssub.s32 %s12, 2
      // Predicated region
      $region53: #{patch_moe_basic_block.6} parent=51 // pred_check
        %p830 = pneg %p213
      $region54: #{patch_moe_basic_block.6} parent=51 // pred_check_branch
        %832 = sbr.rel (%p830) target = $region56
      $region55: #{patch_moe_basic_block.6} parent=51 // pred_region
        %s833 = smul.u32 4, %s24
        %p834 = scmp.lt.s32.totalorder %s23, 1
        %s835 = scalar_select %p834, %s23, 1
        %p836 = scmp.lt.s32.totalorder %s833, 3
        %s837 = scalar_select %p836, %s833, 3
        %s838 = smul.addr %s835, 4
        %s839 = sadd.s32 %s837, %s838
        %s840 = smul.addr %s839, 8
        %s841 = scalar_lea.vmem %s6, %s840
      $region56: #{patch_moe_basic_block.6} parent=51 // pred_fallthru
        _
    $region52: #{patch_moe_basic_block.6} parent=5 // pred_fallthru
      _
  $region6: #{patch_moe_basic_block.6} parent=0 // loop_footer
    %s16 = sadd.s32 1, %s12
  $region7: #{patch_moe_basic_block.6} parent=0 // loop_footer_branch
    %11 = sbr.rel target = $region3
  $region8: #{patch_moe_basic_block.6} parent=0 // loop_exit
    _

</llo_original>
